<compile_context>
chip_gen: v7x
topology: tpu7x:2x2x1
jax: 0.10.0
libtpu: 0.0.40
codegen_flags: <defaults>
</compile_context>

<pallas_src>
import jax
import jax.numpy as jnp
from jax import lax
from jax.experimental import pallas as pl
from jax.experimental.pallas import tpu as pltpu


def _banded_rhs(w_flat, width):
    """Banded (Toeplitz-in-W) GEMM RHS for a 3x3x3 conv with padding=1.

    w_flat : (27, Cin, Cout) with tap order (kd, kh, kw).
    Returns (9*W*Cin, W*Cout) with
      R[((kd*3+kh)*W + w_in)*Cin + ci, w*Cout + co]
        = w[kd, kh, w_in - w + 1, ci, co]   if 0 <= w_in - w + 1 < 3 else 0.
    The band encodes both the kw tap offset and the W-direction zero padding,
    so the kernel's im2col only has to gather the 9 (kd, kh) slabs.
    """
    cin, cout = w_flat.shape[1], w_flat.shape[2]
    w5 = w_flat.reshape(3, 3, 3, cin, cout)                     # (kd,kh,kw,ci,co)
    eye = jnp.stack([jnp.eye(width, width, k=1 - kw, dtype=w_flat.dtype)
                     for kw in range(3)])                       # (kw, w_in, w)
    r = jnp.einsum("abkic,kuv->abuivc", w5, eye)                # (kd,kh,w_in,ci,w,co)
    return r.reshape(9 * width * cin, width * cout)


def blockb_kernel(x_ref, w13_ref, b13_ref, w2_ref, b2_ref, o_ref, pad_ref):
    # x_ref   : (1, D+2, H+2, W*Cin)   D/H zero-padded input, lane-dense W*Cin
    # w13_ref : (9*W*Cin, 2*W*Cout)    [left1 | right] banded weights (fused GEMM)
    # b13_ref : (1, 2*W*Cout)          [left1 | right] biases, tiled over w
    # w2_ref  : (9*W*Cout, W*Cout)     left2 banded weights
    # b2_ref  : (1, W*Cout)            left2 bias, tiled over w
    # o_ref   : (1, D*H, W*Cout)       lane-dense output slab for one sample
    # pad_ref : VMEM (D+2, H+2, W*Cout) persistent scratch: padded left1 act.
    xv = x_ref[0]
    Dp, Hp, _ = xv.shape
    D, H = Dp - 2, Hp - 2
    WC = w2_ref.shape[-1]            # W * Cout

    def dh_slabs(src, lanes):
        # 9 full-lane (kd, kh) slabs; kw offsets + W padding live in the banded
        # RHS, so there are no narrow per-channel stripes and no lane rolls.
        return jnp.concatenate(
            [src[kd:kd + D, kh:kh + H, :].reshape(D * H, lanes)
             for kd in range(3) for kh in range(3)], axis=-1)

    # conv1 (left1) + conv3 (right): one GEMM on the shared slab matrix.
    lhs1 = dh_slabs(xv, xv.shape[-1])                           # (D*H, 9*W*Cin)
    y13 = jnp.maximum(
        jnp.dot(lhs1, w13_ref[...], preferred_element_type=jnp.float32)
        + b13_ref[0], 0.0)                                      # (D*H, 2*W*Cout)
    l1 = y13[:, :WC]                                            # left1 + ReLU
    r = y13[:, WC:]                                             # right + ReLU

    # Padded left1 activation: zero only the D/H border each step (cheap,
    # megacore-safe), then one dense full-lane store of the interior.
    pad_ref[0:1, :, :] = jnp.zeros((1, Hp, WC), jnp.float32)
    pad_ref[Dp - 1:Dp, :, :] = jnp.zeros((1, Hp, WC), jnp.float32)
    pad_ref[:, 0:1, :] = jnp.zeros((Dp, 1, WC), jnp.float32)
    pad_ref[:, Hp - 1:Hp, :] = jnp.zeros((Dp, 1, WC), jnp.float32)
    pad_ref[1:1 + D, 1:1 + H, :] = l1.reshape(D, H, WC)

    # conv2 (left2): slab im2col straight out of the lane-dense scratch.
    lhs2 = dh_slabs(pad_ref, WC)                                # (D*H, 9*W*Cout)
    l2 = jnp.maximum(
        jnp.dot(lhs2, w2_ref[...], preferred_element_type=jnp.float32)
        + b2_ref[0], 0.0)                                       # (D*H, W*Cout)

    # Sum path — already in the lane-dense output layout, no repack.
    o_ref[0] = (l2 + r).astype(o_ref.dtype)


def block_b_forward(x_ncdhw, params):
    """BlockB forward. x_ncdhw: (N, Cin, D, H, W) float32 -> (N, Cout, D, H, W)."""
    w1, b1, w2, b2, w3, b3 = (params["w1"], params["b1"], params["w2"],
                              params["b2"], params["w3"], params["b3"])
    N, Cin, D, H, W = x_ncdhw.shape
    Cout = b1.shape[-1]
    Dp, Hp = D + 2, H + 2
    WCi, WCo = W * Cin, W * Cout

    # NCDHW -> NDHWC -> lane-dense (N, D, H, W*Cin); zero-pad D/H by 1
    # (W padding is absorbed by the banded RHS).
    x = jnp.transpose(x_ncdhw, (0, 2, 3, 4, 1)).reshape(N, D, H, WCi)
    xp = jnp.pad(x, ((0, 0), (1, 1), (1, 1), (0, 0)))

    # Wrapper-side weight packing: banded RHS, left1 & right fused along N.
    w13 = jnp.concatenate([_banded_rhs(w1, W), _banded_rhs(w3, W)], axis=-1)
    b13 = jnp.concatenate([jnp.tile(b1, W), jnp.tile(b3, W)]).reshape(1, 2 * WCo)
    w2f = _banded_rhs(w2, W)
    b2f = jnp.tile(b2, W).reshape(1, WCo)

    # TODO(synk): for production D/H/W add a second grid axis over D-slabs with
    # a 1-voxel halo and derive the slab size per TPU generation from
    # pltpu.get_tpu_info().vmem_capacity_bytes.
    grid_spec = pltpu.PrefetchScalarGridSpec(
        num_scalar_prefetch=0,
        grid=(N,),
        in_specs=[
            pl.BlockSpec((1, Dp, Hp, WCi), lambda n: (n, 0, 0, 0)),
            pl.BlockSpec((9 * WCi, 2 * WCo), lambda n: (0, 0)),
            pl.BlockSpec((1, 2 * WCo), lambda n: (0, 0)),
            pl.BlockSpec((9 * WCo, WCo), lambda n: (0, 0)),
            pl.BlockSpec((1, WCo), lambda n: (0, 0)),
        ],
        out_specs=pl.BlockSpec((1, D * H, WCo), lambda n: (n, 0, 0)),
        scratch_shapes=[pltpu.VMEM((Dp, Hp, WCo), jnp.float32)],
    )

    out = pl.pallas_call(
        blockb_kernel,
        out_shape=jax.ShapeDtypeStruct((N, D * H, WCo), jnp.float32),
        grid_spec=grid_spec,
        compiler_params=pltpu.CompilerParams(
            dimension_semantics=("parallel",),
            vmem_limit_bytes=48 * 1024 * 1024),
    )(xp, w13, b13, w2f, b2f)

    # (N, D*H, W*Cout) -> NDHWC -> NCDHW
    return jnp.transpose(out.reshape(N, D, H, W, Cout), (0, 4, 1, 2, 3))


def _conv_ref(x_ndhwc, w_flat, b):
    """Pure-JAX reference conv (SAME, stride 1)."""
    cin, cout = w_flat.shape[1], w_flat.shape[2]
    w_dhwio = w_flat.reshape(3, 3, 3, cin, cout)
    y = lax.conv_general_dilated(
        x_ndhwc, w_dhwio, window_strides=(1, 1, 1), padding="SAME",
        dimension_numbers=("NDHWC", "DHWIO", "NDHWC"))
    return y + b


def blockb_reference(x_ncdhw, params):
    x = jnp.transpose(x_ncdhw, (0, 2, 3, 4, 1))
    l = jnp.maximum(_conv_ref(x, params["w1"], params["b1"]), 0.0)
    l = jnp.maximum(_conv_ref(l, params["w2"], params["b2"]), 0.0)
    r = jnp.maximum(_conv_ref(x, params["w3"], params["b3"]), 0.0)
    return jnp.transpose(l + r, (0, 4, 1, 2, 3))


def init_params(key, n_input, n_output):
    """Deterministic synthetic parameters.

    Weights are stored as (27, Cin, Cout) = PyTorch (Cout, Cin, 3, 3, 3)
    transposed to (3, 3, 3, Cin, Cout) and flattened over the 27 taps.
    """
    ks = jax.random.split(key, 6)

    def w(k, cin, cout):
        scale = 1.0 / jnp.sqrt(cin * 27.0)
        return (jax.random.uniform(k, (27, cin, cout), jnp.float32,
                                   minval=-1.0, maxval=1.0) * scale)

    def b(k, cin, cout):
        scale = 1.0 / jnp.sqrt(cin * 27.0)
        return (jax.random.uniform(k, (cout,), jnp.float32,
                                   minval=-1.0, maxval=1.0) * scale)

    return {
        "w1": w(ks[0], n_input, n_output),  "b1": b(ks[1], n_input, n_output),
        "w2": w(ks[2], n_output, n_output), "b2": b(ks[3], n_output, n_output),
        "w3": w(ks[4], n_input, n_output),  "b3": b(ks[5], n_input, n_output),
    }


if __name__ == "__main__":
    key = jax.random.PRNGKey(0)
    k_x, k_p = jax.random.split(key)

    N, C_IN, C_OUT = 2, 4, 8
    D = H = W = 8

    x = jax.random.normal(k_x, (N, C_IN, D, H, W), jnp.float32)
    params = init_params(k_p, C_IN, C_OUT)

    out = jax.jit(block_b_forward)(x, params)
    out = jax.block_until_ready(out)

    ref = blockb_reference(x, params)
    assert out.shape == (N, C_OUT, D, H, W)
    assert jnp.max(jnp.abs(out - ref)) < 1e-4, "mismatch vs JAX reference"

    print("KERNEL_OK")
</pallas_src>

<mosaic_0001>
module attributes {stable_mosaic.version = 11 : i64} {
  func.func @blockb_kernel(%arg0: i32, %arg1: memref<1x10x10x32xf32, #tpu.memory_space<vmem>>, %arg2: memref<288x128xf32, #tpu.memory_space<vmem>>, %arg3: memref<1x128xf32, #tpu.memory_space<vmem>>, %arg4: memref<576x64xf32, #tpu.memory_space<vmem>>, %arg5: memref<1x64xf32, #tpu.memory_space<vmem>>, %arg6: memref<1x64x64xf32, #tpu.memory_space<vmem>>, %arg7: memref<10x10x64xf32, #tpu.memory_space<vmem>>) attributes {dimension_semantics = [#tpu.dimension_semantics<parallel>], iteration_bounds = array<i64: 2>, scalar_prefetch = 0 : i64, scratch_operands = 1 : i64, tpu.core_type = #tpu.core_type<tc>, window_params = [{transform_indices = @transform_0, window_bounds = array<i64: 1, 10, 10, 32>}, {pipeline_mode = #tpu.pipeline_mode<synchronous>, transform_indices = @transform_1, window_bounds = array<i64: 288, 128>}, {pipeline_mode = #tpu.pipeline_mode<synchronous>, transform_indices = @transform_2, window_bounds = array<i64: 1, 128>}, {pipeline_mode = #tpu.pipeline_mode<synchronous>, transform_indices = @transform_3, window_bounds = array<i64: 576, 64>}, {pipeline_mode = #tpu.pipeline_mode<synchronous>, transform_indices = @transform_4, window_bounds = array<i64: 1, 64>}, {transform_indices = @transform_5, window_bounds = array<i64: 1, 64, 64>}]} {
    %c0 = arith.constant 0 : index
    %c0_0 = arith.constant 0 : index
    %c0_1 = arith.constant 0 : index
    %c0_2 = arith.constant 0 : index
    %0 = vector.load %arg1[%c0, %c0_0, %c0_1, %c0_2] : memref<1x10x10x32xf32, #tpu.memory_space<vmem>>, vector<1x10x10x32xf32>
    %1 = vector.shape_cast %0 : vector<1x10x10x32xf32> to vector<10x10x32xf32>
    %2 = vector.extract_strided_slice %1 {offsets = [0, 0, 0], sizes = [8, 8, 32], strides = [1, 1, 1]} : vector<10x10x32xf32> to vector<8x8x32xf32>
    %3 = vector.shape_cast %2 : vector<8x8x32xf32> to vector<64x32xf32>
    %4 = vector.extract_strided_slice %1 {offsets = [0, 1, 0], sizes = [8, 8, 32], strides = [1, 1, 1]} : vector<10x10x32xf32> to vector<8x8x32xf32>
    %5 = vector.shape_cast %4 : vector<8x8x32xf32> to vector<64x32xf32>
    %6 = vector.extract_strided_slice %1 {offsets = [0, 2, 0], sizes = [8, 8, 32], strides = [1, 1, 1]} : vector<10x10x32xf32> to vector<8x8x32xf32>
    %7 = vector.shape_cast %6 : vector<8x8x32xf32> to vector<64x32xf32>
    %8 = vector.extract_strided_slice %1 {offsets = [1, 0, 0], sizes = [8, 8, 32], strides = [1, 1, 1]} : vector<10x10x32xf32> to vector<8x8x32xf32>
    %9 = vector.shape_cast %8 : vector<8x8x32xf32> to vector<64x32xf32>
    %10 = vector.extract_strided_slice %1 {offsets = [1, 1, 0], sizes = [8, 8, 32], strides = [1, 1, 1]} : vector<10x10x32xf32> to vector<8x8x32xf32>
    %11 = vector.shape_cast %10 : vector<8x8x32xf32> to vector<64x32xf32>
    %12 = vector.extract_strided_slice %1 {offsets = [1, 2, 0], sizes = [8, 8, 32], strides = [1, 1, 1]} : vector<10x10x32xf32> to vector<8x8x32xf32>
    %13 = vector.shape_cast %12 : vector<8x8x32xf32> to vector<64x32xf32>
    %14 = vector.extract_strided_slice %1 {offsets = [2, 0, 0], sizes = [8, 8, 32], strides = [1, 1, 1]} : vector<10x10x32xf32> to vector<8x8x32xf32>
    %15 = vector.shape_cast %14 : vector<8x8x32xf32> to vector<64x32xf32>
    %16 = vector.extract_strided_slice %1 {offsets = [2, 1, 0], sizes = [8, 8, 32], strides = [1, 1, 1]} : vector<10x10x32xf32> to vector<8x8x32xf32>
    %17 = vector.shape_cast %16 : vector<8x8x32xf32> to vector<64x32xf32>
    %18 = vector.extract_strided_slice %1 {offsets = [2, 2, 0], sizes = [8, 8, 32], strides = [1, 1, 1]} : vector<10x10x32xf32> to vector<8x8x32xf32>
    %19 = vector.shape_cast %18 : vector<8x8x32xf32> to vector<64x32xf32>
    %20 = tpu.concatenate %3, %5, %7, %9, %11, %13, %15, %17, %19 in 1 : vector<64x32xf32>, vector<64x32xf32>, vector<64x32xf32>, vector<64x32xf32>, vector<64x32xf32>, vector<64x32xf32>, vector<64x32xf32>, vector<64x32xf32>, vector<64x32xf32> -> vector<64x288xf32>
    %c0_3 = arith.constant 0 : index
    %c0_4 = arith.constant 0 : index
    %21 = vector.load %arg2[%c0_3, %c0_4] : memref<288x128xf32, #tpu.memory_space<vmem>>, vector<288x128xf32>
    %cst = arith.constant dense<0.000000e+00> : vector<64x128xf32>
    %22 = tpu.matmul %20, %21, %cst {dimension_numbers = #tpu.dot_dimension_numbers<[1], [0], [0], [1], [0, 0, 1, 1], [], []>} : vector<64x288xf32>, vector<288x128xf32>, vector<64x128xf32> -> vector<64x128xf32>
    %c0_5 = arith.constant 0 : index
    %c0_6 = arith.constant 0 : index
    %23 = vector.load %arg3[%c0_5, %c0_6] : memref<1x128xf32, #tpu.memory_space<vmem>>, vector<1x128xf32>
    %24 = vector.shape_cast %23 : vector<1x128xf32> to vector<128xf32>
    %25 = vector.shape_cast %24 : vector<128xf32> to vector<1x128xf32>
    %26 = vector.broadcast %25 : vector<1x128xf32> to vector<64x128xf32>
    %27 = arith.addf %22, %26 : vector<64x128xf32>
    %cst_7 = arith.constant 0.000000e+00 : f32
    %28 = vector.broadcast %cst_7 : f32 to vector<64x128xf32>
    %29 = arith.maximumf %27, %28 : vector<64x128xf32>
    %30 = vector.extract_strided_slice %29 {offsets = [0, 0], sizes = [64, 64], strides = [1, 1]} : vector<64x128xf32> to vector<64x64xf32>
    %31 = vector.extract_strided_slice %29 {offsets = [0, 64], sizes = [64, 64], strides = [1, 1]} : vector<64x128xf32> to vector<64x64xf32>
    %cst_8 = arith.constant 0.000000e+00 : f32
    %32 = vector.broadcast %cst_8 : f32 to vector<1x10x64xf32>
    %c0_9 = arith.constant 0 : index
    %c0_10 = arith.constant 0 : index
    %c0_11 = arith.constant 0 : index
    %33 = vector.load %arg7[%c0_9, %c0_10, %c0_11] : memref<10x10x64xf32, #tpu.memory_space<vmem>>, vector<1x10x64xf32>
    tpu.vector_store %arg7[%c0_9, %c0_10, %c0_11], %32 {strides = array<i32>} : memref<10x10x64xf32, #tpu.memory_space<vmem>>, vector<1x10x64xf32>,
    %cst_12 = arith.constant 0.000000e+00 : f32
    %34 = vector.broadcast %cst_12 : f32 to vector<1x10x64xf32>
    %c9 = arith.constant 9 : index
    %c0_13 = arith.constant 0 : index
    %c0_14 = arith.constant 0 : index
    %35 = vector.load %arg7[%c9, %c0_13, %c0_14] : memref<10x10x64xf32, #tpu.memory_space<vmem>>, vector<1x10x64xf32>
    tpu.vector_store %arg7[%c9, %c0_13, %c0_14], %34 {strides = array<i32>} : memref<10x10x64xf32, #tpu.memory_space<vmem>>, vector<1x10x64xf32>,
    %cst_15 = arith.constant 0.000000e+00 : f32
    %36 = vector.broadcast %cst_15 : f32 to vector<10x1x64xf32>
    %c0_16 = arith.constant 0 : index
    %c0_17 = arith.constant 0 : index
    %c0_18 = arith.constant 0 : index
    %37 = vector.load %arg7[%c0_16, %c0_17, %c0_18] : memref<10x10x64xf32, #tpu.memory_space<vmem>>, vector<10x1x64xf32>
    tpu.vector_store %arg7[%c0_16, %c0_17, %c0_18], %36 {strides = array<i32>} : memref<10x10x64xf32, #tpu.memory_space<vmem>>, vector<10x1x64xf32>,
    %cst_19 = arith.constant 0.000000e+00 : f32
    %38 = vector.broadcast %cst_19 : f32 to vector<10x1x64xf32>
    %c0_20 = arith.constant 0 : index
    %c9_21 = arith.constant 9 : index
    %c0_22 = arith.constant 0 : index
    %39 = vector.load %arg7[%c0_20, %c9_21, %c0_22] : memref<10x10x64xf32, #tpu.memory_space<vmem>>, vector<10x1x64xf32>
    tpu.vector_store %arg7[%c0_20, %c9_21, %c0_22], %38 {strides = array<i32>} : memref<10x10x64xf32, #tpu.memory_space<vmem>>, vector<10x1x64xf32>,
    %40 = vector.shape_cast %30 : vector<64x64xf32> to vector<8x8x64xf32>
    %c1 = arith.constant 1 : index
    %c1_23 = arith.constant 1 : index
    %c0_24 = arith.constant 0 : index
    %41 = vector.load %arg7[%c1, %c1_23, %c0_24] : memref<10x10x64xf32, #tpu.memory_space<vmem>>, vector<8x8x64xf32>
    tpu.vector_store %arg7[%c1, %c1_23, %c0_24], %40 {strides = array<i32>} : memref<10x10x64xf32, #tpu.memory_space<vmem>>, vector<8x8x64xf32>,
    %c0_25 = arith.constant 0 : index
    %c0_26 = arith.constant 0 : index
    %c0_27 = arith.constant 0 : index
    %42 = vector.load %arg7[%c0_25, %c0_26, %c0_27] : memref<10x10x64xf32, #tpu.memory_space<vmem>>, vector<8x8x64xf32>
    %43 = vector.shape_cast %42 : vector<8x8x64xf32> to vector<64x64xf32>
    %c0_28 = arith.constant 0 : index
    %c1_29 = arith.constant 1 : index
    %c0_30 = arith.constant 0 : index
    %44 = vector.load %arg7[%c0_28, %c1_29, %c0_30] : memref<10x10x64xf32, #tpu.memory_space<vmem>>, vector<8x8x64xf32>
    %45 = vector.shape_cast %44 : vector<8x8x64xf32> to vector<64x64xf32>
    %c0_31 = arith.constant 0 : index
    %c2 = arith.constant 2 : index
    %c0_32 = arith.constant 0 : index
    %46 = vector.load %arg7[%c0_31, %c2, %c0_32] : memref<10x10x64xf32, #tpu.memory_space<vmem>>, vector<8x8x64xf32>
    %47 = vector.shape_cast %46 : vector<8x8x64xf32> to vector<64x64xf32>
    %c1_33 = arith.constant 1 : index
    %c0_34 = arith.constant 0 : index
    %c0_35 = arith.constant 0 : index
    %48 = vector.load %arg7[%c1_33, %c0_34, %c0_35] : memref<10x10x64xf32, #tpu.memory_space<vmem>>, vector<8x8x64xf32>
    %49 = vector.shape_cast %48 : vector<8x8x64xf32> to vector<64x64xf32>
    %c1_36 = arith.constant 1 : index
    %c1_37 = arith.constant 1 : index
    %c0_38 = arith.constant 0 : index
    %50 = vector.load %arg7[%c1_36, %c1_37, %c0_38] : memref<10x10x64xf32, #tpu.memory_space<vmem>>, vector<8x8x64xf32>
    %51 = vector.shape_cast %50 : vector<8x8x64xf32> to vector<64x64xf32>
    %c1_39 = arith.constant 1 : index
    %c2_40 = arith.constant 2 : index
    %c0_41 = arith.constant 0 : index
    %52 = vector.load %arg7[%c1_39, %c2_40, %c0_41] : memref<10x10x64xf32, #tpu.memory_space<vmem>>, vector<8x8x64xf32>
    %53 = vector.shape_cast %52 : vector<8x8x64xf32> to vector<64x64xf32>
    %c2_42 = arith.constant 2 : index
    %c0_43 = arith.constant 0 : index
    %c0_44 = arith.constant 0 : index
    %54 = vector.load %arg7[%c2_42, %c0_43, %c0_44] : memref<10x10x64xf32, #tpu.memory_space<vmem>>, vector<8x8x64xf32>
    %55 = vector.shape_cast %54 : vector<8x8x64xf32> to vector<64x64xf32>
    %c2_45 = arith.constant 2 : index
    %c1_46 = arith.constant 1 : index
    %c0_47 = arith.constant 0 : index
    %56 = vector.load %arg7[%c2_45, %c1_46, %c0_47] : memref<10x10x64xf32, #tpu.memory_space<vmem>>, vector<8x8x64xf32>
    %57 = vector.shape_cast %56 : vector<8x8x64xf32> to vector<64x64xf32>
    %c2_48 = arith.constant 2 : index
    %c2_49 = arith.constant 2 : index
    %c0_50 = arith.constant 0 : index
    %58 = vector.load %arg7[%c2_48, %c2_49, %c0_50] : memref<10x10x64xf32, #tpu.memory_space<vmem>>, vector<8x8x64xf32>
    %59 = vector.shape_cast %58 : vector<8x8x64xf32> to vector<64x64xf32>
    %60 = tpu.concatenate %43, %45, %47, %49, %51, %53, %55, %57, %59 in 1 : vector<64x64xf32>, vector<64x64xf32>, vector<64x64xf32>, vector<64x64xf32>, vector<64x64xf32>, vector<64x64xf32>, vector<64x64xf32>, vector<64x64xf32>, vector<64x64xf32> -> vector<64x576xf32>
    %c0_51 = arith.constant 0 : index
    %c0_52 = arith.constant 0 : index
    %61 = vector.load %arg4[%c0_51, %c0_52] : memref<576x64xf32, #tpu.memory_space<vmem>>, vector<576x64xf32>
    %cst_53 = arith.constant dense<0.000000e+00> : vector<64x64xf32>
    %62 = tpu.matmul %60, %61, %cst_53 {dimension_numbers = #tpu.dot_dimension_numbers<[1], [0], [0], [1], [0, 0, 1, 1], [], []>} : vector<64x576xf32>, vector<576x64xf32>, vector<64x64xf32> -> vector<64x64xf32>
    %c0_54 = arith.constant 0 : index
    %c0_55 = arith.constant 0 : index
    %63 = vector.load %arg5[%c0_54, %c0_55] : memref<1x64xf32, #tpu.memory_space<vmem>>, vector<1x64xf32>
    %64 = vector.shape_cast %63 : vector<1x64xf32> to vector<64xf32>
    %65 = vector.shape_cast %64 : vector<64xf32> to vector<1x64xf32>
    %66 = vector.broadcast %65 : vector<1x64xf32> to vector<64x64xf32>
    %67 = arith.addf %62, %66 : vector<64x64xf32>
    %cst_56 = arith.constant 0.000000e+00 : f32
    %68 = vector.broadcast %cst_56 : f32 to vector<64x64xf32>
    %69 = arith.maximumf %67, %68 : vector<64x64xf32>
    %70 = arith.addf %69, %31 : vector<64x64xf32>
    %c0_57 = arith.constant 0 : index
    %c0_58 = arith.constant 0 : index
    %c0_59 = arith.constant 0 : index
    %71 = vector.load %arg6[%c0_57, %c0_58, %c0_59] : memref<1x64x64xf32, #tpu.memory_space<vmem>>, vector<1x64x64xf32>
    %72 = vector.shape_cast %71 : vector<1x64x64xf32> to vector<64x64xf32>
    %73 = vector.shape_cast %70 : vector<64x64xf32> to vector<1x64x64xf32>
    tpu.vector_store %arg6[%c0_57, %c0_58, %c0_59], %73 {strides = array<i32>} : memref<1x64x64xf32, #tpu.memory_space<vmem>>, vector<1x64x64xf32>,
    return
  }
  func.func @transform_0(%arg0: i32) -> (i32, i32, i32, i32) {
    %c0_i32 = arith.constant 0 : i32
    %c0_i32_0 = arith.constant 0 : i32
    %c0_i32_1 = arith.constant 0 : i32
    %c0_i32_2 = arith.constant 0 : i32
    return %arg0, %c0_i32, %c0_i32_0, %c0_i32_1 : i32, i32, i32, i32
  }
  func.func @transform_1(%arg0: i32) -> (i32, i32) {
    %c0_i32 = arith.constant 0 : i32
    %c0_i32_0 = arith.constant 0 : i32
    %c0_i32_1 = arith.constant 0 : i32
    return %c0_i32, %c0_i32_0 : i32, i32
  }
  func.func @transform_2(%arg0: i32) -> (i32, i32) {
    %c0_i32 = arith.constant 0 : i32
    %c0_i32_0 = arith.constant 0 : i32
    %c0_i32_1 = arith.constant 0 : i32
    return %c0_i32, %c0_i32_0 : i32, i32
  }
  func.func @transform_3(%arg0: i32) -> (i32, i32) {
    %c0_i32 = arith.constant 0 : i32
    %c0_i32_0 = arith.constant 0 : i32
    %c0_i32_1 = arith.constant 0 : i32
    return %c0_i32, %c0_i32_0 : i32, i32
  }
  func.func @transform_4(%arg0: i32) -> (i32, i32) {
    %c0_i32 = arith.constant 0 : i32
    %c0_i32_0 = arith.constant 0 : i32
    %c0_i32_1 = arith.constant 0 : i32
    return %c0_i32, %c0_i32_0 : i32, i32
  }
  func.func @transform_5(%arg0: i32) -> (i32, i32, i32) {
    %c0_i32 = arith.constant 0 : i32
    %c0_i32_0 = arith.constant 0 : i32
    %c0_i32_1 = arith.constant 0 : i32
    return %arg0, %c0_i32, %c0_i32_0 : i32, i32, i32
  }
}

</mosaic_0001>

<llo_original>
// kernel: tile.18
$region0: #{tile.18}
  #allocation0 [shape = 's32[1]{0}', space=sflag, size = 0x4, scoped, tag = 'scoped memory for tile.18']
  %s0 = inlined_call_operand.vmem [shape: f32[8], index: 0, kind: input, shape index: {}]
  %s1 = inlined_call_operand.vmem [shape: f32[8,8], index: 1, kind: output, shape index: {}]
  // Predicated region
  $region2: #{tile.18} parent=0 // pred_check
    _
  $region3: #{tile.18} parent=0 // pred_check_branch
    %3 = sbr.rel (0) target = $region5
  $region4: #{tile.18} parent=0 // pred_region
    _
  $region5: #{tile.18} parent=0 // pred_fallthru
    _
  %v4 = vld [vmem:[%s0] ss:$0 sm:$0xff]
  %5 = vst [vmem:[%s1] sm:$0xff] %v4

// kernel: tile.19
$region0: #{tile.19}
  %s0 = inlined_call_operand.vmem [shape: f32[8,8], index: 0, kind: input, shape index: {}]
  %s1 = inlined_call_operand.vmem [shape: f32[64], index: 1, kind: output, shape index: {}]
  $region1: #{tile.19} parent=0
    #allocation0 [shape = 'u8[4096]{0}', space=vmem, size = 0x1000, scoped, tag = 'scoped mem for output reshape']
    %v2 = vld [vmem:[%s0] sm:$0x1]
    %vm3 = vcmask 64512
    %4 = vst.msk [vmem:[#allocation0] sm:$0x1] %vm3, %v2
    %s5 = scalar_lea.vmem %s0, 7
    %v6 = vld [vmem:[%s5] sm:$0x1]
    %7 = vrot.lane.b32.xlu0 %v6, 56
    %v8 = vpop.permute.xlu0 %7
    %vm9 = vcmask 523712
    %10 = vst.msk [vmem:[#allocation0] sm:$0x1] %vm9, %v8
    %s11 = scalar_lea.vmem %s0, 6
    %v12 = vld [vmem:[%s11] sm:$0x1]
    %13 = vrot.lane.b32.xlu0 %v12, 48
    %v14 = vpop.permute.xlu0 %13
    %vm15 = vcmask 458112
    %16 = vst.msk [vmem:[#allocation0] sm:$0x1] %vm15, %v14
    %s17 = scalar_lea.vmem %s0, 5
    %v18 = vld [vmem:[%s17] sm:$0x1]
    %19 = vrot.lane.b32.xlu0 %v18, 40
    %v20 = vpop.permute.xlu0 %19
    %vm21 = vcmask 392512
    %22 = vst.msk [vmem:[#allocation0] sm:$0x1] %vm21, %v20
    %s23 = scalar_lea.vmem %s0, 4
    %v24 = vld [vmem:[%s23] sm:$0x1]
    %25 = vrot.lane.b32.xlu0 %v24, 32
    %v26 = vpop.permute.xlu0 %25
    %vm27 = vcmask 326912
    %28 = vst.msk [vmem:[#allocation0] sm:$0x1] %vm27, %v26
    %s29 = scalar_lea.vmem %s0, 3
    %v30 = vld [vmem:[%s29] sm:$0x1]
    %31 = vrot.lane.b32.xlu0 %v30, 24
    %v32 = vpop.permute.xlu0 %31
    %vm33 = vcmask 261312
    %34 = vst.msk [vmem:[#allocation0] sm:$0x1] %vm33, %v32
    %s35 = scalar_lea.vmem %s0, 2
    %v36 = vld [vmem:[%s35] sm:$0x1]
    %37 = vrot.lane.b32.xlu0 %v36, 16
    %v38 = vpop.permute.xlu0 %37
    %vm39 = vcmask 195712
    %40 = vst.msk [vmem:[#allocation0] sm:$0x1] %vm39, %v38
    %s41 = scalar_lea.vmem %s0, 1
    %v42 = vld [vmem:[%s41] sm:$0x1]
    %43 = vrot.lane.b32.xlu0 %v42, 8
    %v44 = vpop.permute.xlu0 %43
    %vm45 = vcmask 130112
    %46 = vst.msk [vmem:[#allocation0] sm:$0x1] %vm45, %v44
    %s48 = sshllo.u32 0, 1
    %v50 = vld [vmem:[#allocation0] sm:%s48]
    %s51 = sshllo.u32 0, 1
    %52 = vst [vmem:[%s1] sm:%s51] %v50

// kernel: tile.29
$region0: #{tile.29}
  %s0 = inlined_call_operand.vmem [shape: f32[8,8], index: 0, kind: input, shape index: {}]
  %s1 = inlined_call_operand.vmem [shape: f32[1,64], index: 1, kind: output, shape index: {}]
  $region1: #{tile.29} parent=0
    #allocation0 [shape = 'u8[4096]{0}', space=vmem, size = 0x1000, scoped, tag = 'scoped mem for output reshape']
    %v2 = vld [vmem:[%s0] sm:$0x1]
    %vm3 = vcmask 64512
    %4 = vst.msk [vmem:[#allocation0] sm:$0x1] %vm3, %v2
    %s5 = scalar_lea.vmem %s0, 7
    %v6 = vld [vmem:[%s5] sm:$0x1]
    %7 = vrot.lane.b32.xlu0 %v6, 56
    %v8 = vpop.permute.xlu0 %7
    %vm9 = vcmask 523712
    %10 = vst.msk [vmem:[#allocation0] sm:$0x1] %vm9, %v8
    %s11 = scalar_lea.vmem %s0, 6
    %v12 = vld [vmem:[%s11] sm:$0x1]
    %13 = vrot.lane.b32.xlu0 %v12, 48
    %v14 = vpop.permute.xlu0 %13
    %vm15 = vcmask 458112
    %16 = vst.msk [vmem:[#allocation0] sm:$0x1] %vm15, %v14
    %s17 = scalar_lea.vmem %s0, 5
    %v18 = vld [vmem:[%s17] sm:$0x1]
    %19 = vrot.lane.b32.xlu0 %v18, 40
    %v20 = vpop.permute.xlu0 %19
    %vm21 = vcmask 392512
    %22 = vst.msk [vmem:[#allocation0] sm:$0x1] %vm21, %v20
    %s23 = scalar_lea.vmem %s0, 4
    %v24 = vld [vmem:[%s23] sm:$0x1]
    %25 = vrot.lane.b32.xlu0 %v24, 32
    %v26 = vpop.permute.xlu0 %25
    %vm27 = vcmask 326912
    %28 = vst.msk [vmem:[#allocation0] sm:$0x1] %vm27, %v26
    %s29 = scalar_lea.vmem %s0, 3
    %v30 = vld [vmem:[%s29] sm:$0x1]
    %31 = vrot.lane.b32.xlu0 %v30, 24
    %v32 = vpop.permute.xlu0 %31
    %vm33 = vcmask 261312
    %34 = vst.msk [vmem:[#allocation0] sm:$0x1] %vm33, %v32
    %s35 = scalar_lea.vmem %s0, 2
    %v36 = vld [vmem:[%s35] sm:$0x1]
    %37 = vrot.lane.b32.xlu0 %v36, 16
    %v38 = vpop.permute.xlu0 %37
    %vm39 = vcmask 195712
    %40 = vst.msk [vmem:[#allocation0] sm:$0x1] %vm39, %v38
    %s41 = scalar_lea.vmem %s0, 1
    %v42 = vld [vmem:[%s41] sm:$0x1]
    %43 = vrot.lane.b32.xlu0 %v42, 8
    %v44 = vpop.permute.xlu0 %43
    %vm45 = vcmask 130112
    %46 = vst.msk [vmem:[#allocation0] sm:$0x1] %vm45, %v44
    %s48 = sshllo.u32 0, 1
    %v50 = vld [vmem:[#allocation0] sm:%s48]
    %s51 = sshllo.u32 0, 1
    %52 = vst [vmem:[%s1] sm:%s51] %v50

// kernel: block_b_forward.1
$region0: #{block_b_forward.1}
  #allocation0 [shape = 'u32[]', space=smem, size = 0x4, offset = 0x4, fixed_abs, tag = 'smem constant byte address 0x4 - core index']
  #allocation1 [shape = 'u32[144,128]{1,0:T(1,128)}', space=vmem, size = 0x12000, scoped, tag = 'internal scratch']
  #allocation2 [shape = 'f32[10,10,64]{2,1,0:T(8,128)}', space=vmem, size = 0x14000, scoped, tag = 'scratch operand']
  %s0 = inlined_call_operand.vmem [shape: f32[2,10,10,32], index: 0, kind: input, shape index: {}]
  %s1 = inlined_call_operand.vmem [shape: f32[288,128], index: 1, kind: input, shape index: {}]
  %s2 = inlined_call_operand.vmem [shape: f32[1,128], index: 2, kind: input, shape index: {}]
  %s3 = inlined_call_operand.vmem [shape: f32[576,64], index: 3, kind: input, shape index: {}]
  %s4 = inlined_call_operand.vmem [shape: f32[1,64], index: 4, kind: input, shape index: {}]
  %s5 = inlined_call_operand.vmem [shape: f32[2,64,64], index: 5, kind: output, shape index: {}]
  %s6 = sld [smem:[#allocation0]]
  $region53: #{block_b_forward.1} parent=0
    _
  %s8 = ssub.s32 1, %s6
  %s9 = scalar_select 0, %s8, %s6
  loop: start=0, step=1, limit=4
  $region2: #{block_b_forward.1} parent=0 // loop_pre_header
    _
  $region3: #{block_b_forward.1} parent=0 // loop_header
    %s11 = sphi 0, %s15
    %p12 = scmp.ge.s32.totalorder %s11, 4
    %s21 = sphi 0, %s23
    %s24 = sphi 0, %s21
    %s25 = sphi 0, %s24
    %s41 = sphi 0, %s25
    %s45 = sphi 0, %s45
    %s47 = sphi 0, %s45
    %s48 = sphi 0, %s47
    %s62 = sphi 0, %s48
    %s66 = sphi 0, %s66
    %s68 = sphi 0, %s66
    %s69 = sphi 0, %s68
    %s83 = sphi 0, %s69
    %s87 = sphi 0, %s87
    %s89 = sphi 0, %s87
    %s90 = sphi 0, %s89
    %s104 = sphi 0, %s90
    %s108 = sphi 0, %s108
    %s110 = sphi 0, %s108
    %s111 = sphi 0, %s110
    %s125 = sphi 0, %s111
    %s131 = sphi 0, %s133
    %s134 = sphi 0, %s131
    %s135 = sphi 0, %s134
    %s151 = sphi 0, %s135
  $region4: #{block_b_forward.1} parent=0 // loop_header_branch
    %14 = sbr.rel (%p12) target = $region8
  $region5: #{block_b_forward.1} parent=0 // loop_body
    %s16 = ssub.s32 %s11, 1
    %s17 = ssub.s32 %s11, 2
    %s18 = sadd.s32 %s11, 1
    %s19 = ssub.s32 %s11, %s18
    %p20 = scmp.eq.s32.totalorder %s19, 0
    %s22 = sadd.s32 %s21, 1
    %s23 = scalar_select %p20, %s21, %s22
    %p26 = pneg %p20
    %p27 = scmp.eq.s32.totalorder %s11, 1
    %p28 = por %p26, %p27
    %p29 = scmp.ne.s32.totalorder %s21, %s24
    %p30 = scmp.eq.s32.totalorder %s11, 0
    %p31 = por %p29, %p30
    %p32 = scmp.ne.s32.totalorder %s21, %s24
    %p33 = scmp.eq.s32.totalorder %s16, 1
    %p34 = por %p32, %p33
    %p35 = scmp.ne.s32.totalorder %s24, %s25
    %p36 = scmp.eq.s32.totalorder %s16, 0
    %p37 = por %p35, %p36
    %p38 = scmp.ne.s32.totalorder %s24, %s25
    %p39 = scmp.eq.s32.totalorder %s17, 1
    %p40 = por %p38, %p39
    %p42 = scmp.ne.s32.totalorder %s25, %s41
    %p43 = scmp.eq.s32.totalorder %s17, 0
    %p44 = por %p42, %p43
    %s46 = sadd.s32 %s45, 1
    %p49 = scmp.eq.s32.totalorder %s11, 1
    %p50 = scmp.ne.s32.totalorder %s45, %s47
    %p51 = scmp.eq.s32.totalorder %s11, 0
    %p52 = por %p50, %p51
    %p53 = scmp.ne.s32.totalorder %s45, %s47
    %p54 = scmp.eq.s32.totalorder %s16, 1
    %p55 = por %p53, %p54
    %p56 = scmp.ne.s32.totalorder %s47, %s48
    %p57 = scmp.eq.s32.totalorder %s16, 0
    %p58 = por %p56, %p57
    %p59 = scmp.ne.s32.totalorder %s47, %s48
    %p60 = scmp.eq.s32.totalorder %s17, 1
    %p61 = por %p59, %p60
    %p63 = scmp.ne.s32.totalorder %s48, %s62
    %p64 = scmp.eq.s32.totalorder %s17, 0
    %p65 = por %p63, %p64
    %s67 = sadd.s32 %s66, 1
    %p70 = scmp.eq.s32.totalorder %s11, 1
    %p71 = scmp.ne.s32.totalorder %s66, %s68
    %p72 = scmp.eq.s32.totalorder %s11, 0
    %p73 = por %p71, %p72
    %p74 = scmp.ne.s32.totalorder %s66, %s68
    %p75 = scmp.eq.s32.totalorder %s16, 1
    %p76 = por %p74, %p75
    %p77 = scmp.ne.s32.totalorder %s68, %s69
    %p78 = scmp.eq.s32.totalorder %s16, 0
    %p79 = por %p77, %p78
    %p80 = scmp.ne.s32.totalorder %s68, %s69
    %p81 = scmp.eq.s32.totalorder %s17, 1
    %p82 = por %p80, %p81
    %p84 = scmp.ne.s32.totalorder %s69, %s83
    %p85 = scmp.eq.s32.totalorder %s17, 0
    %p86 = por %p84, %p85
    %s88 = sadd.s32 %s87, 1
    %p91 = scmp.eq.s32.totalorder %s11, 1
    %p92 = scmp.ne.s32.totalorder %s87, %s89
    %p93 = scmp.eq.s32.totalorder %s11, 0
    %p94 = por %p92, %p93
    %p95 = scmp.ne.s32.totalorder %s87, %s89
    %p96 = scmp.eq.s32.totalorder %s16, 1
    %p97 = por %p95, %p96
    %p98 = scmp.ne.s32.totalorder %s89, %s90
    %p99 = scmp.eq.s32.totalorder %s16, 0
    %p100 = por %p98, %p99
    %p101 = scmp.ne.s32.totalorder %s89, %s90
    %p102 = scmp.eq.s32.totalorder %s17, 1
    %p103 = por %p101, %p102
    %p105 = scmp.ne.s32.totalorder %s90, %s104
    %p106 = scmp.eq.s32.totalorder %s17, 0
    %p107 = por %p105, %p106
    %s109 = sadd.s32 %s108, 1
    %p112 = scmp.eq.s32.totalorder %s11, 1
    %p113 = scmp.ne.s32.totalorder %s108, %s110
    %p114 = scmp.eq.s32.totalorder %s11, 0
    %p115 = por %p113, %p114
    %p116 = scmp.ne.s32.totalorder %s108, %s110
    %p117 = scmp.eq.s32.totalorder %s16, 1
    %p118 = por %p116, %p117
    %p119 = scmp.ne.s32.totalorder %s110, %s111
    %p120 = scmp.eq.s32.totalorder %s16, 0
    %p121 = por %p119, %p120
    %p122 = scmp.ne.s32.totalorder %s110, %s111
    %p123 = scmp.eq.s32.totalorder %s17, 1
    %p124 = por %p122, %p123
    %p126 = scmp.ne.s32.totalorder %s111, %s125
    %p127 = scmp.eq.s32.totalorder %s17, 0
    %p128 = por %p126, %p127
    %s129 = ssub.s32 %s11, %s18
    %p130 = scmp.eq.s32.totalorder %s129, 0
    %s132 = sadd.s32 %s131, 1
    %s133 = scalar_select %p130, %s131, %s132
    %p136 = pneg %p130
    %p137 = scmp.eq.s32.totalorder %s11, 1
    %p138 = por %p136, %p137
    %p139 = scmp.ne.s32.totalorder %s131, %s134
    %p140 = scmp.eq.s32.totalorder %s11, 0
    %p141 = por %p139, %p140
    %p142 = scmp.ne.s32.totalorder %s131, %s134
    %p143 = scmp.eq.s32.totalorder %s16, 1
    %p144 = por %p142, %p143
    %p145 = scmp.ne.s32.totalorder %s134, %s135
    %p146 = scmp.eq.s32.totalorder %s16, 0
    %p147 = por %p145, %p146
    %p148 = scmp.ne.s32.totalorder %s134, %s135
    %p149 = scmp.eq.s32.totalorder %s17, 1
    %p150 = por %p148, %p149
    %p152 = scmp.ne.s32.totalorder %s135, %s151
    %p153 = scmp.eq.s32.totalorder %s17, 0
    %p154 = por %p152, %p153
    %p155 = scmp.le.s32.totalorder 1, %s11
    %p156 = scmp.lt.s32.totalorder %s11, 3
    %p157 = pnand %p155, %p156
    %p158 = pneg %p157
    // Predicated region
    $region9: #{block_b_forward.1} parent=5 // pred_check
      _
    $region10: #{block_b_forward.1} parent=5 // pred_check_branch
      %160 = sbr.rel (%p157) target = $region12
    $region11: #{block_b_forward.1} parent=5 // pred_region
      %s161 = ssub.s32 %s11, 1
      // Predicated region
      $region13: #{block_b_forward.1} parent=11 // pred_check
        %p162 = pneg %p58
      $region14: #{block_b_forward.1} parent=11 // pred_check_branch
        %164 = sbr.rel (%p162) target = $region16
      $region15: #{block_b_forward.1} parent=11 // pred_region
        _
      $region16: #{block_b_forward.1} parent=11 // pred_fallthru
        _
      // Predicated region
      $region17: #{block_b_forward.1} parent=11 // pred_check
        %p165 = pneg %p79
      $region18: #{block_b_forward.1} parent=11 // pred_check_branch
        %167 = sbr.rel (%p165) target = $region20
      $region19: #{block_b_forward.1} parent=11 // pred_region
        _
      $region20: #{block_b_forward.1} parent=11 // pred_fallthru
        _
      // Predicated region
      $region21: #{block_b_forward.1} parent=11 // pred_check
        %p168 = pneg %p100
      $region22: #{block_b_forward.1} parent=11 // pred_check_branch
        %170 = sbr.rel (%p168) target = $region24
      $region23: #{block_b_forward.1} parent=11 // pred_region
        _
      $region24: #{block_b_forward.1} parent=11 // pred_fallthru
        _
      // Predicated region
      $region25: #{block_b_forward.1} parent=11 // pred_check
        %p171 = pneg %p121
      $region26: #{block_b_forward.1} parent=11 // pred_check_branch
        %173 = sbr.rel (%p171) target = $region28
      $region27: #{block_b_forward.1} parent=11 // pred_region
        _
      $region28: #{block_b_forward.1} parent=11 // pred_fallthru
        _
    $region12: #{block_b_forward.1} parent=5 // pred_fallthru
      _
    %p174 = scmp.lt.s32.totalorder %s11, 2
    // Predicated region
    $region29: #{block_b_forward.1} parent=5 // pred_check
      %p175 = pneg %p174
    $region30: #{block_b_forward.1} parent=5 // pred_check_branch
      %177 = sbr.rel (%p175) target = $region32
    $region31: #{block_b_forward.1} parent=5 // pred_region
      // Predicated region
      $region33: #{block_b_forward.1} parent=31 // pred_check
        %p178 = pneg %p31
      $region34: #{block_b_forward.1} parent=31 // pred_check_branch
        %180 = sbr.rel (%p178) target = $region36
      $region35: #{block_b_forward.1} parent=31 // pred_region
        %p181 = scmp.lt.s32.totalorder %s11, 1
        %s182 = scalar_select %p181, %s11, 1
        %s183 = smul.addr %s182, 20
        %s184 = smul.addr %s183, 8
        %s185 = scalar_lea.vmem %s0, %s184
      $region36: #{block_b_forward.1} parent=31 // pred_fallthru
        _
    $region32: #{block_b_forward.1} parent=5 // pred_fallthru
      _
    %p186 = scmp.le.s32.totalorder 1, %s11
    %p187 = scmp.lt.s32.totalorder %s11, 3
    %p188 = pnand %p186, %p187
    %p189 = pneg %p188
    // Predicated region
    $region37: #{block_b_forward.1} parent=5 // pred_check
      _
    $region38: #{block_b_forward.1} parent=5 // pred_check_branch
      %191 = sbr.rel (%p188) target = $region40
    $region39: #{block_b_forward.1} parent=5 // pred_region
      %s192 = ssub.s32 %s11, 1
      %p193 = scmp.lt.s32.totalorder %s16, 1
      %s194 = scalar_select %p193, %s16, 1
      %s195 = smul.addr %s194, 20
      %s196 = smul.addr %s195, 8
      %s197 = scalar_lea.vmem %s0, %s196
      %p198 = pneg %p37
      %p199 = pneg %p34
      %p200 = pneg %p58
      %p201 = pneg %p55
      %p202 = pneg %p79
      %p203 = pneg %p76
      %p204 = pneg %p100
      %p205 = pneg %p97
      %p206 = pneg %p121
      %p207 = pneg %p118
      %p208 = pneg %p147
      %p209 = pneg %p144
      %p210 = scmp.lt.s32.totalorder %s16, 1
      %s211 = scalar_select %p210, %s16, 1
      %s212 = smul.addr %s211, 8
      %s213 = smul.addr %s212, 8
      %s214 = scalar_lea.vmem %s5, %s213
      %p215 = scmp.lt.s32.totalorder %s16, 1
      %s216 = scalar_select %p215, %s16, 1
      %s217 = smul.addr %s216, 20
      %s218 = smul.addr %s217, 8
      %s219 = scalar_lea.vmem %s0, %s218
      %p220 = scmp.lt.s32.totalorder %s16, 1
      %s221 = scalar_select %p220, %s16, 1
      %s222 = smul.addr %s221, 8
      %s223 = smul.addr %s222, 8
      %s224 = scalar_lea.vmem %s5, %s223
      %v225 = vld [vmem:[%s219] sm:$0xff]
      %v226 = vld [vmem:[%s219 + $0x8] sm:$0x3]
      %v227 = vld [vmem:[%s219 + $0x10] sm:$0xff]
      %v228 = vld [vmem:[%s219 + $0x18] sm:$0x3]
      %v229 = vld [vmem:[%s219 + $0x20] sm:$0xff]
      %v230 = vld [vmem:[%s219 + $0x28] sm:$0x3]
      %v231 = vld [vmem:[%s219 + $0x30] sm:$0xff]
      %v232 = vld [vmem:[%s219 + $0x38] sm:$0x3]
      %v233 = vld [vmem:[%s219 + $0x40] sm:$0xff]
      %v234 = vld [vmem:[%s219 + $0x48] sm:$0x3]
      %v235 = vld [vmem:[%s219 + $0x50] sm:$0xff]
      %v236 = vld [vmem:[%s219 + $0x58] sm:$0x3]
      %v237 = vld [vmem:[%s219 + $0x60] sm:$0xff]
      %v238 = vld [vmem:[%s219 + $0x68] sm:$0x3]
      %v239 = vld [vmem:[%s219 + $0x70] sm:$0xff]
      %v240 = vld [vmem:[%s219 + $0x78] sm:$0x3]
      %v241 = vld [vmem:[%s219 + $0x80] sm:$0xff]
      %v242 = vld [vmem:[%s219 + $0x88] sm:$0x3]
      %v243 = vld [vmem:[%s219 + $0x90] sm:$0xff]
      %v244 = vld [vmem:[%s219 + $0x98] sm:$0x3]
      %vm261 = vcmask 1046528
      %v262 = vrot.slane %v225, 1
      %v263 = vrot.slane %v226, 1
      %v264 = vsel %vm261, %v262, %v263
      %v265 = vrot.slane %v227, 1
      %v266 = vrot.slane %v228, 1
      %v267 = vsel %vm261, %v265, %v266
      %v268 = vrot.slane %v229, 1
      %v269 = vrot.slane %v230, 1
      %v270 = vsel %vm261, %v268, %v269
      %v271 = vrot.slane %v231, 1
      %v272 = vrot.slane %v232, 1
      %v273 = vsel %vm261, %v271, %v272
      %v274 = vrot.slane %v233, 1
      %v275 = vrot.slane %v234, 1
      %v276 = vsel %vm261, %v274, %v275
      %v277 = vrot.slane %v235, 1
      %v278 = vrot.slane %v236, 1
      %v279 = vsel %vm261, %v277, %v278
      %v280 = vrot.slane %v237, 1
      %v281 = vrot.slane %v238, 1
      %v282 = vsel %vm261, %v280, %v281
      %v283 = vrot.slane %v239, 1
      %v284 = vrot.slane %v240, 1
      %v285 = vsel %vm261, %v283, %v284
      %vm286 = vcmask 1045504
      %v287 = vrot.slane %v225, 2
      %v288 = vrot.slane %v226, 2
      %v289 = vsel %vm286, %v287, %v288
      %v290 = vrot.slane %v227, 2
      %v291 = vrot.slane %v228, 2
      %v292 = vsel %vm286, %v290, %v291
      %v293 = vrot.slane %v229, 2
      %v294 = vrot.slane %v230, 2
      %v295 = vsel %vm286, %v293, %v294
      %v296 = vrot.slane %v231, 2
      %v297 = vrot.slane %v232, 2
      %v298 = vsel %vm286, %v296, %v297
      %v299 = vrot.slane %v233, 2
      %v300 = vrot.slane %v234, 2
      %v301 = vsel %vm286, %v299, %v300
      %v302 = vrot.slane %v235, 2
      %v303 = vrot.slane %v236, 2
      %v304 = vsel %vm286, %v302, %v303
      %v305 = vrot.slane %v237, 2
      %v306 = vrot.slane %v238, 2
      %v307 = vsel %vm286, %v305, %v306
      %v308 = vrot.slane %v239, 2
      %v309 = vrot.slane %v240, 2
      %v310 = vsel %vm286, %v308, %v309
      %v313 = vrot.slane %v241, 1
      %v314 = vrot.slane %v242, 1
      %v315 = vsel %vm261, %v313, %v314
      %v324 = vrot.slane %v241, 2
      %v325 = vrot.slane %v242, 2
      %v326 = vsel %vm286, %v324, %v325
      %v329 = vrot.slane %v243, 1
      %v330 = vrot.slane %v244, 1
      %v331 = vsel %vm261, %v329, %v330
      %v332 = vrot.slane %v243, 2
      %v333 = vrot.slane %v244, 2
      %v334 = vsel %vm286, %v332, %v333
      %335 = vrot.lane.b32.xlu0 %v264, 32
      %v336 = vpop.permute.xlu0 %335
      %337 = vrot.lane.b32.xlu0 %v267, 32
      %v338 = vpop.permute.xlu0 %337
      %339 = vrot.lane.b32.xlu0 %v270, 32
      %v340 = vpop.permute.xlu0 %339
      %341 = vrot.lane.b32.xlu0 %v273, 32
      %v342 = vpop.permute.xlu0 %341
      %343 = vrot.lane.b32.xlu0 %v276, 32
      %v344 = vpop.permute.xlu0 %343
      %345 = vrot.lane.b32.xlu0 %v279, 32
      %v346 = vpop.permute.xlu0 %345
      %347 = vrot.lane.b32.xlu0 %v282, 32
      %v348 = vpop.permute.xlu0 %347
      %349 = vrot.lane.b32.xlu0 %v285, 32
      %v350 = vpop.permute.xlu0 %349
      %359 = vrot.lane.b32.xlu0 %v289, 64
      %v360 = vpop.permute.xlu0 %359
      %361 = vrot.lane.b32.xlu0 %v292, 64
      %v362 = vpop.permute.xlu0 %361
      %363 = vrot.lane.b32.xlu0 %v295, 64
      %v364 = vpop.permute.xlu0 %363
      %365 = vrot.lane.b32.xlu0 %v298, 64
      %v366 = vpop.permute.xlu0 %365
      %367 = vrot.lane.b32.xlu0 %v301, 64
      %v368 = vpop.permute.xlu0 %367
      %369 = vrot.lane.b32.xlu0 %v304, 64
      %v370 = vpop.permute.xlu0 %369
      %371 = vrot.lane.b32.xlu0 %v307, 64
      %v372 = vpop.permute.xlu0 %371
      %373 = vrot.lane.b32.xlu0 %v310, 64
      %v374 = vpop.permute.xlu0 %373
      %383 = vrot.lane.b32.xlu0 %v227, 96
      %v384 = vpop.permute.xlu0 %383
      %385 = vrot.lane.b32.xlu0 %v229, 96
      %v386 = vpop.permute.xlu0 %385
      %387 = vrot.lane.b32.xlu0 %v231, 96
      %v388 = vpop.permute.xlu0 %387
      %389 = vrot.lane.b32.xlu0 %v233, 96
      %v390 = vpop.permute.xlu0 %389
      %391 = vrot.lane.b32.xlu0 %v235, 96
      %v392 = vpop.permute.xlu0 %391
      %393 = vrot.lane.b32.xlu0 %v237, 96
      %v394 = vpop.permute.xlu0 %393
      %395 = vrot.lane.b32.xlu0 %v239, 96
      %v396 = vpop.permute.xlu0 %395
      %397 = vrot.lane.b32.xlu0 %v241, 96
      %v398 = vpop.permute.xlu0 %397
      %407 = vrot.lane.b32.xlu0 %v292, 32
      %v408 = vpop.permute.xlu0 %407
      %409 = vrot.lane.b32.xlu0 %v295, 32
      %v410 = vpop.permute.xlu0 %409
      %411 = vrot.lane.b32.xlu0 %v298, 32
      %v412 = vpop.permute.xlu0 %411
      %413 = vrot.lane.b32.xlu0 %v301, 32
      %v414 = vpop.permute.xlu0 %413
      %415 = vrot.lane.b32.xlu0 %v304, 32
      %v416 = vpop.permute.xlu0 %415
      %417 = vrot.lane.b32.xlu0 %v307, 32
      %v418 = vpop.permute.xlu0 %417
      %419 = vrot.lane.b32.xlu0 %v310, 32
      %v420 = vpop.permute.xlu0 %419
      %421 = vrot.lane.b32.xlu0 %v326, 32
      %v422 = vpop.permute.xlu0 %421
      %431 = vrot.lane.b32.xlu0 %v229, 64
      %v432 = vpop.permute.xlu0 %431
      %433 = vrot.lane.b32.xlu0 %v231, 64
      %v434 = vpop.permute.xlu0 %433
      %435 = vrot.lane.b32.xlu0 %v233, 64
      %v436 = vpop.permute.xlu0 %435
      %437 = vrot.lane.b32.xlu0 %v235, 64
      %v438 = vpop.permute.xlu0 %437
      %439 = vrot.lane.b32.xlu0 %v237, 64
      %v440 = vpop.permute.xlu0 %439
      %441 = vrot.lane.b32.xlu0 %v239, 64
      %v442 = vpop.permute.xlu0 %441
      %443 = vrot.lane.b32.xlu0 %v241, 64
      %v444 = vpop.permute.xlu0 %443
      %445 = vrot.lane.b32.xlu0 %v243, 64
      %v446 = vpop.permute.xlu0 %445
      %455 = vrot.lane.b32.xlu0 %v270, 96
      %v456 = vpop.permute.xlu0 %455
      %457 = vrot.lane.b32.xlu0 %v273, 96
      %v458 = vpop.permute.xlu0 %457
      %459 = vrot.lane.b32.xlu0 %v276, 96
      %v460 = vpop.permute.xlu0 %459
      %461 = vrot.lane.b32.xlu0 %v279, 96
      %v462 = vpop.permute.xlu0 %461
      %463 = vrot.lane.b32.xlu0 %v282, 96
      %v464 = vpop.permute.xlu0 %463
      %465 = vrot.lane.b32.xlu0 %v285, 96
      %v466 = vpop.permute.xlu0 %465
      %467 = vrot.lane.b32.xlu0 %v315, 96
      %v468 = vpop.permute.xlu0 %467
      %469 = vrot.lane.b32.xlu0 %v331, 96
      %v470 = vpop.permute.xlu0 %469
      %vm479 = vcmask 261120
      %v480 = vsel %vm479, %v225, %v336
      %v481 = vsel %vm479, %v227, %v338
      %v482 = vsel %vm479, %v229, %v340
      %v483 = vsel %vm479, %v231, %v342
      %v484 = vsel %vm479, %v233, %v344
      %v485 = vsel %vm479, %v235, %v346
      %v486 = vsel %vm479, %v237, %v348
      %v487 = vsel %vm479, %v239, %v350
      %vm488 = vcmask 523264
      %v489 = vsel %vm488, %v480, %v360
      %v490 = vsel %vm488, %v481, %v362
      %v491 = vsel %vm488, %v482, %v364
      %v492 = vsel %vm488, %v483, %v366
      %v493 = vsel %vm488, %v484, %v368
      %v494 = vsel %vm488, %v485, %v370
      %v495 = vsel %vm488, %v486, %v372
      %v496 = vsel %vm488, %v487, %v374
      %vm497 = vcmask 785408
      %v498 = vsel %vm497, %v489, %v384
      %v499 = vsel %vm497, %v490, %v386
      %v500 = vsel %vm497, %v491, %v388
      %v501 = vsel %vm497, %v492, %v390
      %v502 = vsel %vm497, %v493, %v392
      %v503 = vsel %vm497, %v494, %v394
      %v504 = vsel %vm497, %v495, %v396
      %v505 = vsel %vm497, %v496, %v398
      %v506 = vsel %vm479, %v267, %v408
      %v507 = vsel %vm479, %v270, %v410
      %v508 = vsel %vm479, %v273, %v412
      %v509 = vsel %vm479, %v276, %v414
      %v510 = vsel %vm479, %v279, %v416
      %v511 = vsel %vm479, %v282, %v418
      %v512 = vsel %vm479, %v285, %v420
      %v513 = vsel %vm479, %v315, %v422
      %v514 = vsel %vm488, %v506, %v432
      %v515 = vsel %vm488, %v507, %v434
      %v516 = vsel %vm488, %v508, %v436
      %v517 = vsel %vm488, %v509, %v438
      %v518 = vsel %vm488, %v510, %v440
      %v519 = vsel %vm488, %v511, %v442
      %v520 = vsel %vm488, %v512, %v444
      %v521 = vsel %vm488, %v513, %v446
      %v522 = vsel %vm497, %v514, %v456
      %v523 = vsel %vm497, %v515, %v458
      %v524 = vsel %vm497, %v516, %v460
      %v525 = vsel %vm497, %v517, %v462
      %v526 = vsel %vm497, %v518, %v464
      %v527 = vsel %vm497, %v519, %v466
      %v528 = vsel %vm497, %v520, %v468
      %v529 = vsel %vm497, %v521, %v470
      %v530 = vld [vmem:[%s1] sm:$0xff]
      %v531 = vld [vmem:[%s1 + $0x8] sm:$0xff]
      %v532 = vld [vmem:[%s1 + $0x10] sm:$0xff]
      %v533 = vld [vmem:[%s1 + $0x18] sm:$0xff]
      %v534 = vld [vmem:[%s1 + $0x20] sm:$0xff]
      %v535 = vld [vmem:[%s1 + $0x28] sm:$0xff]
      %v536 = vld [vmem:[%s1 + $0x30] sm:$0xff]
      %v537 = vld [vmem:[%s1 + $0x38] sm:$0xff]
      %v538 = vld [vmem:[%s1 + $0x40] sm:$0xff]
      %v539 = vld [vmem:[%s1 + $0x48] sm:$0xff]
      %v540 = vld [vmem:[%s1 + $0x50] sm:$0xff]
      %v541 = vld [vmem:[%s1 + $0x58] sm:$0xff]
      %v542 = vld [vmem:[%s1 + $0x60] sm:$0xff]
      %v543 = vld [vmem:[%s1 + $0x68] sm:$0xff]
      %v544 = vld [vmem:[%s1 + $0x70] sm:$0xff]
      %v545 = vld [vmem:[%s1 + $0x78] sm:$0xff]
      %v546 = vld [vmem:[%s1 + $0x80] sm:$0xff]
      %v547 = vld [vmem:[%s1 + $0x88] sm:$0xff]
      %v548 = vld [vmem:[%s1 + $0x90] sm:$0xff]
      %v549 = vld [vmem:[%s1 + $0x98] sm:$0xff]
      %v550 = vld [vmem:[%s1 + $0xa0] sm:$0xff]
      %v551 = vld [vmem:[%s1 + $0xa8] sm:$0xff]
      %v552 = vld [vmem:[%s1 + $0xb0] sm:$0xff]
      %v553 = vld [vmem:[%s1 + $0xb8] sm:$0xff]
      %v554 = vld [vmem:[%s1 + $0xc0] sm:$0xff]
      %v555 = vld [vmem:[%s1 + $0xc8] sm:$0xff]
      %v556 = vld [vmem:[%s1 + $0xd0] sm:$0xff]
      %v557 = vld [vmem:[%s1 + $0xd8] sm:$0xff]
      %v558 = vld [vmem:[%s1 + $0xe0] sm:$0xff]
      %v559 = vld [vmem:[%s1 + $0xe8] sm:$0xff]
      %v560 = vld [vmem:[%s1 + $0xf0] sm:$0xff]
      %v561 = vld [vmem:[%s1 + $0xf8] sm:$0xff]
      %v562 = vld [vmem:[%s1 + $0x100] sm:$0xff]
      %v563 = vld [vmem:[%s1 + $0x108] sm:$0xff]
      %v564 = vld [vmem:[%s1 + $0x110] sm:$0xff]
      %v565 = vld [vmem:[%s1 + $0x118] sm:$0xff]
      %v566 = vld [vmem:[%s2] sm:$0x1]
      %v568 = vlaneseq
      %v569 = vshrl.u32 %v568, 7
      %v570 = vsub.s32 0, %v569
      %v571 = vrot.slane %v566, %v570
      %v573 = vsel %vm479, %v295, 0
      %v575 = vsel %vm479, %v298, 0
      %v577 = vsel %vm479, %v301, 0
      %v579 = vsel %vm479, %v304, 0
      %v581 = vsel %vm479, %v307, 0
      %v583 = vsel %vm479, %v310, 0
      %v585 = vsel %vm479, %v326, 0
      %v587 = vsel %vm479, %v334, 0
      %589 = vmatprep.subr.mxu0 0.0
      %590 = vmatpush1.msra.mxu0 %v530
      %591 = vmatprep.subr.mxu0 0.0
      %592 = vmatpush1.msra.mxu0 %v531
      %593 = vmatprep.subr.mxu0 0.0
      %594 = vmatpush1.msra.mxu0 %v532
      %595 = vmatprep.subr.mxu0 0.0
      %596 = vmatpush1.msra.mxu0 %v533
      %597 = vmatprep.subr.mxu0 0.0
      %598 = vmatpush1.msra.mxu0 %v534
      %599 = vmatprep.subr.mxu0 0.0
      %600 = vmatpush1.msra.mxu0 %v535
      %601 = vmatprep.subr.mxu0 0.0
      %602 = vmatpush1.msra.mxu0 %v536
      %603 = vmatprep.subr.mxu0 0.0
      %604 = vmatpush1.msra.mxu0 %v537
      %605 = vmatprep.subr.mxu0 0.0
      %606 = vmatpush1.msra.mxu0 %v538
      %607 = vmatprep.subr.mxu0 0.0
      %608 = vmatpush1.msra.mxu0 %v539
      %609 = vmatprep.subr.mxu0 0.0
      %610 = vmatpush1.msra.mxu0 %v540
      %611 = vmatprep.subr.mxu0 0.0
      %612 = vmatpush1.msra.mxu0 %v541
      %613 = vmatprep.subr.mxu0 0.0
      %614 = vmatpush1.msra.mxu0 %v542
      %615 = vmatprep.subr.mxu0 0.0
      %616 = vmatpush1.msra.mxu0 %v543
      %617 = vmatprep.subr.mxu0 0.0
      %618 = vmatpush1.msra.mxu0 %v544
      %619 = vmatprep.subr.mxu0 0.0
      %620 = vmatpush1.msra.mxu0 %v545
      %621 = vmatprep.subr.mxu0 0.0
      %622 = vmatpush1.msra.mxu0 %v546
      %623 = vmatprep.subr.mxu0 0.0
      %624 = vmatpush1.msra.mxu0 %v547
      %625 = vmatprep.subr.mxu0 0.0
      %626 = vmatpush1.msra.mxu0 %v548
      %627 = vmatprep.subr.mxu0 0.0
      %628 = vmatpush1.msra.mxu0 %v549
      %629 = vmatprep.subr.mxu0 0.0
      %630 = vmatpush1.msra.mxu0 %v550
      %631 = vmatprep.subr.mxu0 0.0
      %632 = vmatpush1.msra.mxu0 %v551
      %633 = vmatprep.subr.mxu0 0.0
      %634 = vmatpush1.msra.mxu0 %v552
      %635 = vmatprep.subr.mxu0 0.0
      %636 = vmatpush1.msra.mxu0 %v553
      %637 = vmatprep.subr.mxu0 0.0
      %638 = vmatpush1.msra.mxu0 %v554
      %639 = vmatprep.subr.mxu0 0.0
      %640 = vmatpush1.msra.mxu0 %v555
      %641 = vmatprep.subr.mxu0 0.0
      %642 = vmatpush1.msra.mxu0 %v556
      %643 = vmatprep.subr.mxu0 0.0
      %644 = vmatpush1.msra.mxu0 %v557
      %645 = vmatprep.subr.mxu0 0.0
      %646 = vmatpush1.msra.mxu0 %v558
      %647 = vmatprep.subr.mxu0 0.0
      %648 = vmatpush1.msra.mxu0 %v559
      %649 = vmatprep.subr.mxu0 0.0
      %650 = vmatpush1.msra.mxu0 %v560
      %651 = vmatprep.subr.mxu0 0.0
      %652 = vmatpush1.msra.mxu0 %v561
      %653 = vmatprep.mubr.f32.mxu0 %v522
      %654 = vmatmul.mubr.f32.gmra.mrb[0].mxu0 %v498
      %v655 = vpop.f32.mrb[0].mxu0
      %v656 = vadd.f32 %v571, %v655
      %v657 = vpop.f32.mrb[0].mxu0
      %658 = vmatprep.mubr.f32.mxu0 %v523
      %659 = vmatmul.mubr.f32.gmra.mrb[0].mxu0 %v499
      %v660 = vpop.f32.mrb[0].mxu0
      %v661 = vadd.f32 %v571, %v660
      %v662 = vpop.f32.mrb[0].mxu0
      %663 = vmatprep.mubr.f32.mxu0 %v524
      %664 = vmatmul.mubr.f32.gmra.mrb[0].mxu0 %v500
      %v665 = vpop.f32.mrb[0].mxu0
      %v666 = vadd.f32 %v571, %v665
      %v667 = vpop.f32.mrb[0].mxu0
      %668 = vmatprep.mubr.f32.mxu0 %v525
      %669 = vmatmul.mubr.f32.gmra.mrb[0].mxu0 %v501
      %v670 = vpop.f32.mrb[0].mxu0
      %v671 = vadd.f32 %v571, %v670
      %v672 = vpop.f32.mrb[0].mxu0
      %673 = vmatprep.mubr.f32.mxu0 %v526
      %674 = vmatmul.mubr.f32.gmra.mrb[0].mxu0 %v502
      %v675 = vpop.f32.mrb[0].mxu0
      %v676 = vadd.f32 %v571, %v675
      %v677 = vpop.f32.mrb[0].mxu0
      %678 = vmatprep.mubr.f32.mxu0 %v527
      %679 = vmatmul.mubr.f32.gmra.mrb[0].mxu0 %v503
      %v680 = vpop.f32.mrb[0].mxu0
      %v681 = vadd.f32 %v571, %v680
      %v682 = vpop.f32.mrb[0].mxu0
      %683 = vmatprep.mubr.f32.mxu0 %v528
      %684 = vmatmul.mubr.f32.gmra.mrb[0].mxu0 %v504
      %v685 = vpop.f32.mrb[0].mxu0
      %v686 = vadd.f32 %v571, %v685
      %v687 = vpop.f32.mrb[0].mxu0
      %688 = vmatprep.mubr.f32.mxu0 %v529
      %689 = vmatmul.mubr.f32.gmra.mrb[0].mxu0 %v505
      %v690 = vpop.f32.mrb[0].mxu0
      %v691 = vadd.f32 %v571, %v690
      %v692 = vpop.f32.mrb[0].mxu0
      %693 = vdwg.mxu0
      %694 = vmatprep.subr.mxu0 0.0
      %695 = vmatpush1.msra.mxu0 %v562
      %696 = vmatprep.subr.mxu0 0.0
      %697 = vmatpush1.msra.mxu0 %v563
      %698 = vmatprep.subr.mxu0 0.0
      %699 = vmatpush1.msra.mxu0 %v564
      %700 = vmatprep.subr.mxu0 0.0
      %701 = vmatpush1.msra.mxu0 %v565
      %702 = vmatprep.subr.mxu0 0.0
      %703 = vmatpush1.msra.mxu0 0.0
      %704 = vmatprep.subr.mxu0 0.0
      %705 = vmatpush1.msra.mxu0 0.0
      %706 = vmatprep.subr.mxu0 0.0
      %707 = vmatpush1.msra.mxu0 0.0
      %708 = vmatprep.subr.mxu0 0.0
      %709 = vmatpush1.msra.mxu0 0.0
      %710 = vmatprep.subr.mxu0 0.0
      %711 = vmatpush1.msra.mxu0 0.0
      %712 = vmatprep.subr.mxu0 0.0
      %713 = vmatpush1.msra.mxu0 0.0
      %714 = vmatprep.subr.mxu0 0.0
      %715 = vmatpush1.msra.mxu0 0.0
      %716 = vmatprep.subr.mxu0 0.0
      %717 = vmatpush1.msra.mxu0 0.0
      %718 = vmatprep.subr.mxu0 0.0
      %719 = vmatpush1.msra.mxu0 0.0
      %720 = vmatprep.subr.mxu0 0.0
      %721 = vmatpush1.msra.mxu0 0.0
      %722 = vmatprep.subr.mxu0 0.0
      %723 = vmatpush1.msra.mxu0 0.0
      %724 = vmatprep.subr.mxu0 0.0
      %725 = vmatpush1.msra.mxu0 0.0
      %726 = vmatprep.subr.mxu0 0.0
      %727 = vmatpush1.msra.mxu0 0.0
      %728 = vmatprep.subr.mxu0 0.0
      %729 = vmatpush1.msra.mxu0 0.0
      %730 = vmatprep.subr.mxu0 0.0
      %731 = vmatpush1.msra.mxu0 0.0
      %732 = vmatprep.subr.mxu0 0.0
      %733 = vmatpush1.msra.mxu0 0.0
      %734 = vmatprep.subr.mxu0 0.0
      %735 = vmatpush1.msra.mxu0 0.0
      %736 = vmatprep.subr.mxu0 0.0
      %737 = vmatpush1.msra.mxu0 0.0
      %738 = vmatprep.subr.mxu0 0.0
      %739 = vmatpush1.msra.mxu0 0.0
      %740 = vmatprep.subr.mxu0 0.0
      %741 = vmatpush1.msra.mxu0 0.0
      %742 = vmatprep.subr.mxu0 0.0
      %743 = vmatpush1.msra.mxu0 0.0
      %744 = vmatprep.subr.mxu0 0.0
      %745 = vmatpush1.msra.mxu0 0.0
      %746 = vmatprep.subr.mxu0 0.0
      %747 = vmatpush1.msra.mxu0 0.0
      %748 = vmatprep.subr.mxu0 0.0
      %749 = vmatpush1.msra.mxu0 0.0
      %750 = vmatprep.subr.mxu0 0.0
      %751 = vmatpush1.msra.mxu0 0.0
      %752 = vmatprep.subr.mxu0 0.0
      %753 = vmatpush1.msra.mxu0 0.0
      %754 = vmatprep.subr.mxu0 0.0
      %755 = vmatpush1.msra.mxu0 0.0
      %756 = vmatprep.subr.mxu0 0.0
      %757 = vmatpush1.msra.mxu0 0.0
      %758 = vmatprep.mubr.f32.mxu0 0.0
      %759 = vmatmul.mubr.f32.gmra.mrb[0].mxu0 %v573
      %v760 = vpop.f32.mrb[0].mxu0
      %v761 = vadd.f32 %v656, %v760
      %v762 = vpop.f32.mrb[0].mxu0
      %763 = vmatprep.mubr.f32.mxu0 0.0
      %764 = vmatmul.mubr.f32.gmra.mrb[0].mxu0 %v575
      %v765 = vpop.f32.mrb[0].mxu0
      %v766 = vadd.f32 %v661, %v765
      %v767 = vpop.f32.mrb[0].mxu0
      %768 = vmatprep.mubr.f32.mxu0 0.0
      %769 = vmatmul.mubr.f32.gmra.mrb[0].mxu0 %v577
      %v770 = vpop.f32.mrb[0].mxu0
      %v771 = vadd.f32 %v666, %v770
      %v772 = vpop.f32.mrb[0].mxu0
      %773 = vmatprep.mubr.f32.mxu0 0.0
      %774 = vmatmul.mubr.f32.gmra.mrb[0].mxu0 %v579
      %v775 = vpop.f32.mrb[0].mxu0
      %v776 = vadd.f32 %v671, %v775
      %v777 = vpop.f32.mrb[0].mxu0
      %778 = vmatprep.mubr.f32.mxu0 0.0
      %779 = vmatmul.mubr.f32.gmra.mrb[0].mxu0 %v581
      %v780 = vpop.f32.mrb[0].mxu0
      %v781 = vadd.f32 %v676, %v780
      %v782 = vpop.f32.mrb[0].mxu0
      %783 = vmatprep.mubr.f32.mxu0 0.0
      %784 = vmatmul.mubr.f32.gmra.mrb[0].mxu0 %v583
      %v785 = vpop.f32.mrb[0].mxu0
      %v786 = vadd.f32 %v681, %v785
      %v787 = vpop.f32.mrb[0].mxu0
      %788 = vmatprep.mubr.f32.mxu0 0.0
      %789 = vmatmul.mubr.f32.gmra.mrb[0].mxu0 %v585
      %v790 = vpop.f32.mrb[0].mxu0
      %v791 = vadd.f32 %v686, %v790
      %v792 = vpop.f32.mrb[0].mxu0
      %793 = vmatprep.mubr.f32.mxu0 0.0
      %794 = vmatmul.mubr.f32.gmra.mrb[0].mxu0 %v587
      %v795 = vpop.f32.mrb[0].mxu0
      %v796 = vadd.f32 %v691, %v795
      %v797 = vpop.f32.mrb[0].mxu0
      %798 = vdwg.mxu0
      %v799 = vmax.f32 %v761, 0.0
      %v800 = vmax.f32 %v766, 0.0
      %v801 = vmax.f32 %v771, 0.0
      %v802 = vmax.f32 %v776, 0.0
      %v803 = vmax.f32 %v781, 0.0
      %v804 = vmax.f32 %v786, 0.0
      %v805 = vmax.f32 %v791, 0.0
      %v806 = vmax.f32 %v796, 0.0
      %807 = vst.msk [vmem:[#allocation2] sm:$0xff] %vm488, 0.0
      %vm808 = vcmask 517120
      %809 = vst.msk [vmem:[#allocation2 + $0x8] sm:$0x3] %vm808, 0.0
      %s810 = scalar_lea.vmem [#allocation2], 144
      %811 = vst.msk [vmem:[%s810] sm:$0xff] %vm488, 0.0
      %812 = vst.msk [vmem:[%s810 + $0x8] sm:$0x3] %vm808, 0.0
      %vm813 = vcmask 516096
      %814 = vst.msk [vmem:[#allocation2] sm:$0x1] %vm813, 0.0
      %815 = vst.msk [vmem:[#allocation2 + $0x10] sm:$0x1] %vm813, 0.0
      %816 = vst.msk [vmem:[#allocation2 + $0x20] sm:$0x1] %vm813, 0.0
      %817 = vst.msk [vmem:[#allocation2 + $0x30] sm:$0x1] %vm813, 0.0
      %818 = vst.msk [vmem:[#allocation2 + $0x40] sm:$0x1] %vm813, 0.0
      %819 = vst.msk [vmem:[#allocation2 + $0x50] sm:$0x1] %vm813, 0.0
      %820 = vst.msk [vmem:[#allocation2 + $0x60] sm:$0x1] %vm813, 0.0
      %821 = vst.msk [vmem:[#allocation2 + $0x70] sm:$0x1] %vm813, 0.0
      %822 = vst.msk [vmem:[#allocation2 + $0x80] sm:$0x1] %vm813, 0.0
      %823 = vst.msk [vmem:[#allocation2 + $0x90] sm:$0x1] %vm813, 0.0
      %824 = vst.msk [vmem:[#allocation2 + $0x9] sm:$0x1] %vm813, 0.0
      %825 = vst.msk [vmem:[#allocation2 + $0x19] sm:$0x1] %vm813, 0.0
      %826 = vst.msk [vmem:[#allocation2 + $0x29] sm:$0x1] %vm813, 0.0
      %827 = vst.msk [vmem:[#allocation2 + $0x39] sm:$0x1] %vm813, 0.0
      %828 = vst.msk [vmem:[#allocation2 + $0x49] sm:$0x1] %vm813, 0.0
      %829 = vst.msk [vmem:[#allocation2 + $0x59] sm:$0x1] %vm813, 0.0
      %830 = vst.msk [vmem:[#allocation2 + $0x69] sm:$0x1] %vm813, 0.0
      %831 = vst.msk [vmem:[#allocation2 + $0x79] sm:$0x1] %vm813, 0.0
      %832 = vst.msk [vmem:[#allocation2 + $0x89] sm:$0x1] %vm813, 0.0
      %833 = vst.msk [vmem:[#allocation2 + $0x99] sm:$0x1] %vm813, 0.0
      %s834 = scalar_lea.vmem [#allocation2], 16
      %835 = vst.msk [vmem:[%s834 + $0x1] sm:$0xff] %vm488, %v799
      %836 = vst.msk [vmem:[%s834 + $0x11] sm:$0xff] %vm488, %v800
      %837 = vst.msk [vmem:[%s834 + $0x21] sm:$0xff] %vm488, %v801
      %838 = vst.msk [vmem:[%s834 + $0x31] sm:$0xff] %vm488, %v802
      %839 = vst.msk [vmem:[%s834 + $0x41] sm:$0xff] %vm488, %v803
      %840 = vst.msk [vmem:[%s834 + $0x51] sm:$0xff] %vm488, %v804
      %841 = vst.msk [vmem:[%s834 + $0x61] sm:$0xff] %vm488, %v805
      %842 = vst.msk [vmem:[%s834 + $0x71] sm:$0xff] %vm488, %v806
      %v843 = vld [vmem:[#allocation2] sm:$0xff]
      %v844 = vld [vmem:[#allocation2 + $0x10] sm:$0xff]
      %v845 = vld [vmem:[#allocation2 + $0x20] sm:$0xff]
      %v846 = vld [vmem:[#allocation2 + $0x30] sm:$0xff]
      %v847 = vld [vmem:[#allocation2 + $0x40] sm:$0xff]
      %v848 = vld [vmem:[#allocation2 + $0x50] sm:$0xff]
      %v849 = vld [vmem:[#allocation2 + $0x60] sm:$0xff]
      %v850 = vld [vmem:[#allocation2 + $0x70] sm:$0xff]
      %v851 = vld [vmem:[#allocation2 + $0x1] sm:$0xff]
      %v852 = vld [vmem:[#allocation2 + $0x11] sm:$0xff]
      %v853 = vld [vmem:[#allocation2 + $0x21] sm:$0xff]
      %v854 = vld [vmem:[#allocation2 + $0x31] sm:$0xff]
      %v855 = vld [vmem:[#allocation2 + $0x41] sm:$0xff]
      %v856 = vld [vmem:[#allocation2 + $0x51] sm:$0xff]
      %v857 = vld [vmem:[#allocation2 + $0x61] sm:$0xff]
      %v858 = vld [vmem:[#allocation2 + $0x71] sm:$0xff]
      %v859 = vld [vmem:[#allocation2 + $0x2] sm:$0xff]
      %v860 = vld [vmem:[#allocation2 + $0x12] sm:$0xff]
      %v861 = vld [vmem:[#allocation2 + $0x22] sm:$0xff]
      %v862 = vld [vmem:[#allocation2 + $0x32] sm:$0xff]
      %v863 = vld [vmem:[#allocation2 + $0x42] sm:$0xff]
      %v864 = vld [vmem:[#allocation2 + $0x52] sm:$0xff]
      %v865 = vld [vmem:[#allocation2 + $0x62] sm:$0xff]
      %v866 = vld [vmem:[#allocation2 + $0x72] sm:$0xff]
      %v867 = vld [vmem:[%s834] sm:$0xff]
      %v868 = vld [vmem:[%s834 + $0x10] sm:$0xff]
      %v869 = vld [vmem:[%s834 + $0x20] sm:$0xff]
      %v870 = vld [vmem:[%s834 + $0x30] sm:$0xff]
      %v871 = vld [vmem:[%s834 + $0x40] sm:$0xff]
      %v872 = vld [vmem:[%s834 + $0x50] sm:$0xff]
      %v873 = vld [vmem:[%s834 + $0x60] sm:$0xff]
      %v874 = vld [vmem:[%s834 + $0x70] sm:$0xff]
      %v875 = vld [vmem:[%s834 + $0x1] sm:$0xff]
      %v876 = vld [vmem:[%s834 + $0x11] sm:$0xff]
      %v877 = vld [vmem:[%s834 + $0x21] sm:$0xff]
      %v878 = vld [vmem:[%s834 + $0x31] sm:$0xff]
      %v879 = vld [vmem:[%s834 + $0x41] sm:$0xff]
      %v880 = vld [vmem:[%s834 + $0x51] sm:$0xff]
      %v881 = vld [vmem:[%s834 + $0x61] sm:$0xff]
      %v882 = vld [vmem:[%s834 + $0x71] sm:$0xff]
      %v883 = vld [vmem:[%s834 + $0x2] sm:$0xff]
      %v884 = vld [vmem:[%s834 + $0x12] sm:$0xff]
      %v885 = vld [vmem:[%s834 + $0x22] sm:$0xff]
      %v886 = vld [vmem:[%s834 + $0x32] sm:$0xff]
      %v887 = vld [vmem:[%s834 + $0x42] sm:$0xff]
      %v888 = vld [vmem:[%s834 + $0x52] sm:$0xff]
      %v889 = vld [vmem:[%s834 + $0x62] sm:$0xff]
      %v890 = vld [vmem:[%s834 + $0x72] sm:$0xff]
      %s891 = scalar_lea.vmem [#allocation2], 32
      %v892 = vld [vmem:[%s891] sm:$0xff]
      %v893 = vld [vmem:[%s891 + $0x10] sm:$0xff]
      %v894 = vld [vmem:[%s891 + $0x20] sm:$0xff]
      %v895 = vld [vmem:[%s891 + $0x30] sm:$0xff]
      %v896 = vld [vmem:[%s891 + $0x40] sm:$0xff]
      %v897 = vld [vmem:[%s891 + $0x50] sm:$0xff]
      %v898 = vld [vmem:[%s891 + $0x60] sm:$0xff]
      %v899 = vld [vmem:[%s891 + $0x70] sm:$0xff]
      %v900 = vld [vmem:[%s891 + $0x1] sm:$0xff]
      %v901 = vld [vmem:[%s891 + $0x11] sm:$0xff]
      %v902 = vld [vmem:[%s891 + $0x21] sm:$0xff]
      %v903 = vld [vmem:[%s891 + $0x31] sm:$0xff]
      %v904 = vld [vmem:[%s891 + $0x41] sm:$0xff]
      %v905 = vld [vmem:[%s891 + $0x51] sm:$0xff]
      %v906 = vld [vmem:[%s891 + $0x61] sm:$0xff]
      %v907 = vld [vmem:[%s891 + $0x71] sm:$0xff]
      %v908 = vld [vmem:[%s891 + $0x2] sm:$0xff]
      %v909 = vld [vmem:[%s891 + $0x12] sm:$0xff]
      %v910 = vld [vmem:[%s891 + $0x22] sm:$0xff]
      %v911 = vld [vmem:[%s891 + $0x32] sm:$0xff]
      %v912 = vld [vmem:[%s891 + $0x42] sm:$0xff]
      %v913 = vld [vmem:[%s891 + $0x52] sm:$0xff]
      %v914 = vld [vmem:[%s891 + $0x62] sm:$0xff]
      %v915 = vld [vmem:[%s891 + $0x72] sm:$0xff]
      %924 = vrot.lane.b32.xlu0 %v851, 64
      %v925 = vpop.permute.xlu0 %924
      %926 = vrot.lane.b32.xlu0 %v852, 64
      %v927 = vpop.permute.xlu0 %926
      %928 = vrot.lane.b32.xlu0 %v853, 64
      %v929 = vpop.permute.xlu0 %928
      %930 = vrot.lane.b32.xlu0 %v854, 64
      %v931 = vpop.permute.xlu0 %930
      %932 = vrot.lane.b32.xlu0 %v855, 64
      %v933 = vpop.permute.xlu0 %932
      %934 = vrot.lane.b32.xlu0 %v856, 64
      %v935 = vpop.permute.xlu0 %934
      %936 = vrot.lane.b32.xlu0 %v857, 64
      %v937 = vpop.permute.xlu0 %936
      %938 = vrot.lane.b32.xlu0 %v858, 64
      %v939 = vpop.permute.xlu0 %938
      %956 = vrot.lane.b32.xlu0 %v867, 64
      %v957 = vpop.permute.xlu0 %956
      %958 = vrot.lane.b32.xlu0 %v868, 64
      %v959 = vpop.permute.xlu0 %958
      %960 = vrot.lane.b32.xlu0 %v869, 64
      %v961 = vpop.permute.xlu0 %960
      %962 = vrot.lane.b32.xlu0 %v870, 64
      %v963 = vpop.permute.xlu0 %962
      %964 = vrot.lane.b32.xlu0 %v871, 64
      %v965 = vpop.permute.xlu0 %964
      %966 = vrot.lane.b32.xlu0 %v872, 64
      %v967 = vpop.permute.xlu0 %966
      %968 = vrot.lane.b32.xlu0 %v873, 64
      %v969 = vpop.permute.xlu0 %968
      %970 = vrot.lane.b32.xlu0 %v874, 64
      %v971 = vpop.permute.xlu0 %970
      %988 = vrot.lane.b32.xlu0 %v883, 64
      %v989 = vpop.permute.xlu0 %988
      %990 = vrot.lane.b32.xlu0 %v884, 64
      %v991 = vpop.permute.xlu0 %990
      %992 = vrot.lane.b32.xlu0 %v885, 64
      %v993 = vpop.permute.xlu0 %992
      %994 = vrot.lane.b32.xlu0 %v886, 64
      %v995 = vpop.permute.xlu0 %994
      %996 = vrot.lane.b32.xlu0 %v887, 64
      %v997 = vpop.permute.xlu0 %996
      %998 = vrot.lane.b32.xlu0 %v888, 64
      %v999 = vpop.permute.xlu0 %998
      %1000 = vrot.lane.b32.xlu0 %v889, 64
      %v1001 = vpop.permute.xlu0 %1000
      %1002 = vrot.lane.b32.xlu0 %v890, 64
      %v1003 = vpop.permute.xlu0 %1002
      %1020 = vrot.lane.b32.xlu0 %v900, 64
      %v1021 = vpop.permute.xlu0 %1020
      %1022 = vrot.lane.b32.xlu0 %v901, 64
      %v1023 = vpop.permute.xlu0 %1022
      %1024 = vrot.lane.b32.xlu0 %v902, 64
      %v1025 = vpop.permute.xlu0 %1024
      %1026 = vrot.lane.b32.xlu0 %v903, 64
      %v1027 = vpop.permute.xlu0 %1026
      %1028 = vrot.lane.b32.xlu0 %v904, 64
      %v1029 = vpop.permute.xlu0 %1028
      %1030 = vrot.lane.b32.xlu0 %v905, 64
      %v1031 = vpop.permute.xlu0 %1030
      %1032 = vrot.lane.b32.xlu0 %v906, 64
      %v1033 = vpop.permute.xlu0 %1032
      %1034 = vrot.lane.b32.xlu0 %v907, 64
      %v1035 = vpop.permute.xlu0 %1034
      %v1044 = vsel %vm488, %v843, %v925
      %v1045 = vsel %vm488, %v844, %v927
      %v1046 = vsel %vm488, %v845, %v929
      %v1047 = vsel %vm488, %v846, %v931
      %v1048 = vsel %vm488, %v847, %v933
      %v1049 = vsel %vm488, %v848, %v935
      %v1050 = vsel %vm488, %v849, %v937
      %v1051 = vsel %vm488, %v850, %v939
      %v1052 = vsel %vm488, %v859, %v957
      %v1053 = vsel %vm488, %v860, %v959
      %v1054 = vsel %vm488, %v861, %v961
      %v1055 = vsel %vm488, %v862, %v963
      %v1056 = vsel %vm488, %v863, %v965
      %v1057 = vsel %vm488, %v864, %v967
      %v1058 = vsel %vm488, %v865, %v969
      %v1059 = vsel %vm488, %v866, %v971
      %v1060 = vsel %vm488, %v875, %v989
      %v1061 = vsel %vm488, %v876, %v991
      %v1062 = vsel %vm488, %v877, %v993
      %v1063 = vsel %vm488, %v878, %v995
      %v1064 = vsel %vm488, %v879, %v997
      %v1065 = vsel %vm488, %v880, %v999
      %v1066 = vsel %vm488, %v881, %v1001
      %v1067 = vsel %vm488, %v882, %v1003
      %v1068 = vsel %vm488, %v892, %v1021
      %v1069 = vsel %vm488, %v893, %v1023
      %v1070 = vsel %vm488, %v894, %v1025
      %v1071 = vsel %vm488, %v895, %v1027
      %v1072 = vsel %vm488, %v896, %v1029
      %v1073 = vsel %vm488, %v897, %v1031
      %v1074 = vsel %vm488, %v898, %v1033
      %v1075 = vsel %vm488, %v899, %v1035
      %v1076 = vld [vmem:[%s3] sm:$0xff]
      %v1077 = vld [vmem:[%s3 + $0x8] sm:$0xff]
      %v1078 = vld [vmem:[%s3 + $0x10] sm:$0xff]
      %v1079 = vld [vmem:[%s3 + $0x18] sm:$0xff]
      %v1080 = vld [vmem:[%s3 + $0x20] sm:$0xff]
      %v1081 = vld [vmem:[%s3 + $0x28] sm:$0xff]
      %v1082 = vld [vmem:[%s3 + $0x30] sm:$0xff]
      %v1083 = vld [vmem:[%s3 + $0x38] sm:$0xff]
      %v1084 = vld [vmem:[%s3 + $0x40] sm:$0xff]
      %v1085 = vld [vmem:[%s3 + $0x48] sm:$0xff]
      %v1086 = vld [vmem:[%s3 + $0x50] sm:$0xff]
      %v1087 = vld [vmem:[%s3 + $0x58] sm:$0xff]
      %v1088 = vld [vmem:[%s3 + $0x60] sm:$0xff]
      %v1089 = vld [vmem:[%s3 + $0x68] sm:$0xff]
      %v1090 = vld [vmem:[%s3 + $0x70] sm:$0xff]
      %v1091 = vld [vmem:[%s3 + $0x78] sm:$0xff]
      %v1092 = vld [vmem:[%s3 + $0x80] sm:$0xff]
      %v1093 = vld [vmem:[%s3 + $0x88] sm:$0xff]
      %v1094 = vld [vmem:[%s3 + $0x90] sm:$0xff]
      %v1095 = vld [vmem:[%s3 + $0x98] sm:$0xff]
      %v1096 = vld [vmem:[%s3 + $0xa0] sm:$0xff]
      %v1097 = vld [vmem:[%s3 + $0xa8] sm:$0xff]
      %v1098 = vld [vmem:[%s3 + $0xb0] sm:$0xff]
      %v1099 = vld [vmem:[%s3 + $0xb8] sm:$0xff]
      %v1100 = vld [vmem:[%s3 + $0xc0] sm:$0xff]
      %v1101 = vld [vmem:[%s3 + $0xc8] sm:$0xff]
      %v1102 = vld [vmem:[%s3 + $0xd0] sm:$0xff]
      %v1103 = vld [vmem:[%s3 + $0xd8] sm:$0xff]
      %v1104 = vld [vmem:[%s3 + $0xe0] sm:$0xff]
      %v1105 = vld [vmem:[%s3 + $0xe8] sm:$0xff]
      %v1106 = vld [vmem:[%s3 + $0xf0] sm:$0xff]
      %v1107 = vld [vmem:[%s3 + $0xf8] sm:$0xff]
      %v1108 = vld [vmem:[%s3 + $0x100] sm:$0xff]
      %v1109 = vld [vmem:[%s3 + $0x108] sm:$0xff]
      %v1110 = vld [vmem:[%s3 + $0x110] sm:$0xff]
      %v1111 = vld [vmem:[%s3 + $0x118] sm:$0xff]
      %v1112 = vld [vmem:[%s3 + $0x120] sm:$0xff]
      %v1113 = vld [vmem:[%s3 + $0x128] sm:$0xff]
      %v1114 = vld [vmem:[%s3 + $0x130] sm:$0xff]
      %v1115 = vld [vmem:[%s3 + $0x138] sm:$0xff]
      %v1116 = vld [vmem:[%s3 + $0x140] sm:$0xff]
      %v1117 = vld [vmem:[%s3 + $0x148] sm:$0xff]
      %v1118 = vld [vmem:[%s3 + $0x150] sm:$0xff]
      %v1119 = vld [vmem:[%s3 + $0x158] sm:$0xff]
      %v1120 = vld [vmem:[%s3 + $0x160] sm:$0xff]
      %v1121 = vld [vmem:[%s3 + $0x168] sm:$0xff]
      %v1122 = vld [vmem:[%s3 + $0x170] sm:$0xff]
      %v1123 = vld [vmem:[%s3 + $0x178] sm:$0xff]
      %v1124 = vld [vmem:[%s3 + $0x180] sm:$0xff]
      %v1125 = vld [vmem:[%s3 + $0x188] sm:$0xff]
      %v1126 = vld [vmem:[%s3 + $0x190] sm:$0xff]
      %v1127 = vld [vmem:[%s3 + $0x198] sm:$0xff]
      %v1128 = vld [vmem:[%s3 + $0x1a0] sm:$0xff]
      %v1129 = vld [vmem:[%s3 + $0x1a8] sm:$0xff]
      %v1130 = vld [vmem:[%s3 + $0x1b0] sm:$0xff]
      %v1131 = vld [vmem:[%s3 + $0x1b8] sm:$0xff]
      %v1132 = vld [vmem:[%s3 + $0x1c0] sm:$0xff]
      %v1133 = vld [vmem:[%s3 + $0x1c8] sm:$0xff]
      %v1134 = vld [vmem:[%s3 + $0x1d0] sm:$0xff]
      %v1135 = vld [vmem:[%s3 + $0x1d8] sm:$0xff]
      %v1136 = vld [vmem:[%s3 + $0x1e0] sm:$0xff]
      %v1137 = vld [vmem:[%s3 + $0x1e8] sm:$0xff]
      %v1138 = vld [vmem:[%s3 + $0x1f0] sm:$0xff]
      %v1139 = vld [vmem:[%s3 + $0x1f8] sm:$0xff]
      %v1140 = vld [vmem:[%s3 + $0x200] sm:$0xff]
      %v1141 = vld [vmem:[%s3 + $0x208] sm:$0xff]
      %v1142 = vld [vmem:[%s3 + $0x210] sm:$0xff]
      %v1143 = vld [vmem:[%s3 + $0x218] sm:$0xff]
      %v1144 = vld [vmem:[%s3 + $0x220] sm:$0xff]
      %v1145 = vld [vmem:[%s3 + $0x228] sm:$0xff]
      %v1146 = vld [vmem:[%s3 + $0x230] sm:$0xff]
      %v1147 = vld [vmem:[%s3 + $0x238] sm:$0xff]
      %v1148 = vld [vmem:[%s4] sm:$0x1]
      %v1150 = vlaneseq
      %v1151 = vshrl.u32 %v1150, 7
      %v1152 = vsub.s32 0, %v1151
      %v1153 = vrot.slane %v1148, %v1152
      %v1156 = vsel %vm488, %v908, 0
      %v1159 = vsel %vm488, %v909, 0
      %v1162 = vsel %vm488, %v910, 0
      %v1165 = vsel %vm488, %v911, 0
      %v1168 = vsel %vm488, %v912, 0
      %v1171 = vsel %vm488, %v913, 0
      %v1174 = vsel %vm488, %v914, 0
      %v1177 = vsel %vm488, %v915, 0
      %1179 = vmatprep.subr.mxu0 0.0
      %1180 = vmatpush1.msra.mxu0 %v1076
      %1181 = vmatprep.subr.mxu0 0.0
      %1182 = vmatpush1.msra.mxu0 %v1077
      %1183 = vmatprep.subr.mxu0 0.0
      %1184 = vmatpush1.msra.mxu0 %v1078
      %1185 = vmatprep.subr.mxu0 0.0
      %1186 = vmatpush1.msra.mxu0 %v1079
      %1187 = vmatprep.subr.mxu0 0.0
      %1188 = vmatpush1.msra.mxu0 %v1080
      %1189 = vmatprep.subr.mxu0 0.0
      %1190 = vmatpush1.msra.mxu0 %v1081
      %1191 = vmatprep.subr.mxu0 0.0
      %1192 = vmatpush1.msra.mxu0 %v1082
      %1193 = vmatprep.subr.mxu0 0.0
      %1194 = vmatpush1.msra.mxu0 %v1083
      %1195 = vmatprep.subr.mxu0 0.0
      %1196 = vmatpush1.msra.mxu0 %v1084
      %1197 = vmatprep.subr.mxu0 0.0
      %1198 = vmatpush1.msra.mxu0 %v1085
      %1199 = vmatprep.subr.mxu0 0.0
      %1200 = vmatpush1.msra.mxu0 %v1086
      %1201 = vmatprep.subr.mxu0 0.0
      %1202 = vmatpush1.msra.mxu0 %v1087
      %1203 = vmatprep.subr.mxu0 0.0
      %1204 = vmatpush1.msra.mxu0 %v1088
      %1205 = vmatprep.subr.mxu0 0.0
      %1206 = vmatpush1.msra.mxu0 %v1089
      %1207 = vmatprep.subr.mxu0 0.0
      %1208 = vmatpush1.msra.mxu0 %v1090
      %1209 = vmatprep.subr.mxu0 0.0
      %1210 = vmatpush1.msra.mxu0 %v1091
      %1211 = vmatprep.subr.mxu0 0.0
      %1212 = vmatpush1.msra.mxu0 %v1092
      %1213 = vmatprep.subr.mxu0 0.0
      %1214 = vmatpush1.msra.mxu0 %v1093
      %1215 = vmatprep.subr.mxu0 0.0
      %1216 = vmatpush1.msra.mxu0 %v1094
      %1217 = vmatprep.subr.mxu0 0.0
      %1218 = vmatpush1.msra.mxu0 %v1095
      %1219 = vmatprep.subr.mxu0 0.0
      %1220 = vmatpush1.msra.mxu0 %v1096
      %1221 = vmatprep.subr.mxu0 0.0
      %1222 = vmatpush1.msra.mxu0 %v1097
      %1223 = vmatprep.subr.mxu0 0.0
      %1224 = vmatpush1.msra.mxu0 %v1098
      %1225 = vmatprep.subr.mxu0 0.0
      %1226 = vmatpush1.msra.mxu0 %v1099
      %1227 = vmatprep.subr.mxu0 0.0
      %1228 = vmatpush1.msra.mxu0 %v1100
      %1229 = vmatprep.subr.mxu0 0.0
      %1230 = vmatpush1.msra.mxu0 %v1101
      %1231 = vmatprep.subr.mxu0 0.0
      %1232 = vmatpush1.msra.mxu0 %v1102
      %1233 = vmatprep.subr.mxu0 0.0
      %1234 = vmatpush1.msra.mxu0 %v1103
      %1235 = vmatprep.subr.mxu0 0.0
      %1236 = vmatpush1.msra.mxu0 %v1104
      %1237 = vmatprep.subr.mxu0 0.0
      %1238 = vmatpush1.msra.mxu0 %v1105
      %1239 = vmatprep.subr.mxu0 0.0
      %1240 = vmatpush1.msra.mxu0 %v1106
      %1241 = vmatprep.subr.mxu0 0.0
      %1242 = vmatpush1.msra.mxu0 %v1107
      %1243 = vmatprep.mubr.f32.mxu0 %v1052
      %1244 = vmatmul.mubr.f32.gmra.mrb[0].mxu0 %v1044
      %v1245 = vpop.f32.mrb[0].mxu0
      %v1246 = vadd.f32 %v1153, %v1245
      %v1247 = vpop.f32.mrb[0].mxu0
      %1248 = vmatprep.mubr.f32.mxu0 %v1053
      %1249 = vmatmul.mubr.f32.gmra.mrb[0].mxu0 %v1045
      %v1250 = vpop.f32.mrb[0].mxu0
      %v1251 = vadd.f32 %v1153, %v1250
      %v1252 = vpop.f32.mrb[0].mxu0
      %1253 = vmatprep.mubr.f32.mxu0 %v1054
      %1254 = vmatmul.mubr.f32.gmra.mrb[0].mxu0 %v1046
      %v1255 = vpop.f32.mrb[0].mxu0
      %v1256 = vadd.f32 %v1153, %v1255
      %v1257 = vpop.f32.mrb[0].mxu0
      %1258 = vmatprep.mubr.f32.mxu0 %v1055
      %1259 = vmatmul.mubr.f32.gmra.mrb[0].mxu0 %v1047
      %v1260 = vpop.f32.mrb[0].mxu0
      %v1261 = vadd.f32 %v1153, %v1260
      %v1262 = vpop.f32.mrb[0].mxu0
      %1263 = vmatprep.mubr.f32.mxu0 %v1056
      %1264 = vmatmul.mubr.f32.gmra.mrb[0].mxu0 %v1048
      %v1265 = vpop.f32.mrb[0].mxu0
      %v1266 = vadd.f32 %v1153, %v1265
      %v1267 = vpop.f32.mrb[0].mxu0
      %1268 = vmatprep.mubr.f32.mxu0 %v1057
      %1269 = vmatmul.mubr.f32.gmra.mrb[0].mxu0 %v1049
      %v1270 = vpop.f32.mrb[0].mxu0
      %v1271 = vadd.f32 %v1153, %v1270
      %v1272 = vpop.f32.mrb[0].mxu0
      %1273 = vmatprep.mubr.f32.mxu0 %v1058
      %1274 = vmatmul.mubr.f32.gmra.mrb[0].mxu0 %v1050
      %v1275 = vpop.f32.mrb[0].mxu0
      %v1276 = vadd.f32 %v1153, %v1275
      %v1277 = vpop.f32.mrb[0].mxu0
      %1278 = vmatprep.mubr.f32.mxu0 %v1059
      %1279 = vmatmul.mubr.f32.gmra.mrb[0].mxu0 %v1051
      %v1280 = vpop.f32.mrb[0].mxu0
      %v1281 = vadd.f32 %v1153, %v1280
      %v1282 = vpop.f32.mrb[0].mxu0
      %1283 = vdwg.mxu0
      %1284 = vmatprep.subr.mxu0 0.0
      %1285 = vmatpush1.msra.mxu0 %v1108
      %1286 = vmatprep.subr.mxu0 0.0
      %1287 = vmatpush1.msra.mxu0 %v1109
      %1288 = vmatprep.subr.mxu0 0.0
      %1289 = vmatpush1.msra.mxu0 %v1110
      %1290 = vmatprep.subr.mxu0 0.0
      %1291 = vmatpush1.msra.mxu0 %v1111
      %1292 = vmatprep.subr.mxu0 0.0
      %1293 = vmatpush1.msra.mxu0 %v1112
      %1294 = vmatprep.subr.mxu0 0.0
      %1295 = vmatpush1.msra.mxu0 %v1113
      %1296 = vmatprep.subr.mxu0 0.0
      %1297 = vmatpush1.msra.mxu0 %v1114
      %1298 = vmatprep.subr.mxu0 0.0
      %1299 = vmatpush1.msra.mxu0 %v1115
      %1300 = vmatprep.subr.mxu0 0.0
      %1301 = vmatpush1.msra.mxu0 %v1116
      %1302 = vmatprep.subr.mxu0 0.0
      %1303 = vmatpush1.msra.mxu0 %v1117
      %1304 = vmatprep.subr.mxu0 0.0
      %1305 = vmatpush1.msra.mxu0 %v1118
      %1306 = vmatprep.subr.mxu0 0.0
      %1307 = vmatpush1.msra.mxu0 %v1119
      %1308 = vmatprep.subr.mxu0 0.0
      %1309 = vmatpush1.msra.mxu0 %v1120
      %1310 = vmatprep.subr.mxu0 0.0
      %1311 = vmatpush1.msra.mxu0 %v1121
      %1312 = vmatprep.subr.mxu0 0.0
      %1313 = vmatpush1.msra.mxu0 %v1122
      %1314 = vmatprep.subr.mxu0 0.0
      %1315 = vmatpush1.msra.mxu0 %v1123
      %1316 = vmatprep.subr.mxu0 0.0
      %1317 = vmatpush1.msra.mxu0 %v1124
      %1318 = vmatprep.subr.mxu0 0.0
      %1319 = vmatpush1.msra.mxu0 %v1125
      %1320 = vmatprep.subr.mxu0 0.0
      %1321 = vmatpush1.msra.mxu0 %v1126
      %1322 = vmatprep.subr.mxu0 0.0
      %1323 = vmatpush1.msra.mxu0 %v1127
      %1324 = vmatprep.subr.mxu0 0.0
      %1325 = vmatpush1.msra.mxu0 %v1128
      %1326 = vmatprep.subr.mxu0 0.0
      %1327 = vmatpush1.msra.mxu0 %v1129
      %1328 = vmatprep.subr.mxu0 0.0
      %1329 = vmatpush1.msra.mxu0 %v1130
      %1330 = vmatprep.subr.mxu0 0.0
      %1331 = vmatpush1.msra.mxu0 %v1131
      %1332 = vmatprep.subr.mxu0 0.0
      %1333 = vmatpush1.msra.mxu0 %v1132
      %1334 = vmatprep.subr.mxu0 0.0
      %1335 = vmatpush1.msra.mxu0 %v1133
      %1336 = vmatprep.subr.mxu0 0.0
      %1337 = vmatpush1.msra.mxu0 %v1134
      %1338 = vmatprep.subr.mxu0 0.0
      %1339 = vmatpush1.msra.mxu0 %v1135
      %1340 = vmatprep.subr.mxu0 0.0
      %1341 = vmatpush1.msra.mxu0 %v1136
      %1342 = vmatprep.subr.mxu0 0.0
      %1343 = vmatpush1.msra.mxu0 %v1137
      %1344 = vmatprep.subr.mxu0 0.0
      %1345 = vmatpush1.msra.mxu0 %v1138
      %1346 = vmatprep.subr.mxu0 0.0
      %1347 = vmatpush1.msra.mxu0 %v1139
      %1348 = vmatprep.mubr.f32.mxu0 %v1068
      %1349 = vmatmul.mubr.f32.gmra.mrb[0].mxu0 %v1060
      %v1350 = vpop.f32.mrb[0].mxu0
      %v1351 = vadd.f32 %v1246, %v1350
      %v1352 = vpop.f32.mrb[0].mxu0
      %1353 = vmatprep.mubr.f32.mxu0 %v1069
      %1354 = vmatmul.mubr.f32.gmra.mrb[0].mxu0 %v1061
      %v1355 = vpop.f32.mrb[0].mxu0
      %v1356 = vadd.f32 %v1251, %v1355
      %v1357 = vpop.f32.mrb[0].mxu0
      %1358 = vmatprep.mubr.f32.mxu0 %v1070
      %1359 = vmatmul.mubr.f32.gmra.mrb[0].mxu0 %v1062
      %v1360 = vpop.f32.mrb[0].mxu0
      %v1361 = vadd.f32 %v1256, %v1360
      %v1362 = vpop.f32.mrb[0].mxu0
      %1363 = vmatprep.mubr.f32.mxu0 %v1071
      %1364 = vmatmul.mubr.f32.gmra.mrb[0].mxu0 %v1063
      %v1365 = vpop.f32.mrb[0].mxu0
      %v1366 = vadd.f32 %v1261, %v1365
      %v1367 = vpop.f32.mrb[0].mxu0
      %1368 = vmatprep.mubr.f32.mxu0 %v1072
      %1369 = vmatmul.mubr.f32.gmra.mrb[0].mxu0 %v1064
      %v1370 = vpop.f32.mrb[0].mxu0
      %v1371 = vadd.f32 %v1266, %v1370
      %v1372 = vpop.f32.mrb[0].mxu0
      %1373 = vmatprep.mubr.f32.mxu0 %v1073
      %1374 = vmatmul.mubr.f32.gmra.mrb[0].mxu0 %v1065
      %v1375 = vpop.f32.mrb[0].mxu0
      %v1376 = vadd.f32 %v1271, %v1375
      %v1377 = vpop.f32.mrb[0].mxu0
      %1378 = vmatprep.mubr.f32.mxu0 %v1074
      %1379 = vmatmul.mubr.f32.gmra.mrb[0].mxu0 %v1066
      %v1380 = vpop.f32.mrb[0].mxu0
      %v1381 = vadd.f32 %v1276, %v1380
      %v1382 = vpop.f32.mrb[0].mxu0
      %1383 = vmatprep.mubr.f32.mxu0 %v1075
      %1384 = vmatmul.mubr.f32.gmra.mrb[0].mxu0 %v1067
      %v1385 = vpop.f32.mrb[0].mxu0
      %v1386 = vadd.f32 %v1281, %v1385
      %v1387 = vpop.f32.mrb[0].mxu0
      %1388 = vdwg.mxu0
      %1389 = vmatprep.subr.mxu0 0.0
      %1390 = vmatpush1.msra.mxu0 %v1140
      %1391 = vmatprep.subr.mxu0 0.0
      %1392 = vmatpush1.msra.mxu0 %v1141
      %1393 = vmatprep.subr.mxu0 0.0
      %1394 = vmatpush1.msra.mxu0 %v1142
      %1395 = vmatprep.subr.mxu0 0.0
      %1396 = vmatpush1.msra.mxu0 %v1143
      %1397 = vmatprep.subr.mxu0 0.0
      %1398 = vmatpush1.msra.mxu0 %v1144
      %1399 = vmatprep.subr.mxu0 0.0
      %1400 = vmatpush1.msra.mxu0 %v1145
      %1401 = vmatprep.subr.mxu0 0.0
      %1402 = vmatpush1.msra.mxu0 %v1146
      %1403 = vmatprep.subr.mxu0 0.0
      %1404 = vmatpush1.msra.mxu0 %v1147
      %1405 = vmatprep.subr.mxu0 0.0
      %1406 = vmatpush1.msra.mxu0 0.0
      %1407 = vmatprep.subr.mxu0 0.0
      %1408 = vmatpush1.msra.mxu0 0.0
      %1409 = vmatprep.subr.mxu0 0.0
      %1410 = vmatpush1.msra.mxu0 0.0
      %1411 = vmatprep.subr.mxu0 0.0
      %1412 = vmatpush1.msra.mxu0 0.0
      %1413 = vmatprep.subr.mxu0 0.0
      %1414 = vmatpush1.msra.mxu0 0.0
      %1415 = vmatprep.subr.mxu0 0.0
      %1416 = vmatpush1.msra.mxu0 0.0
      %1417 = vmatprep.subr.mxu0 0.0
      %1418 = vmatpush1.msra.mxu0 0.0
      %1419 = vmatprep.subr.mxu0 0.0
      %1420 = vmatpush1.msra.mxu0 0.0
      %1421 = vmatprep.subr.mxu0 0.0
      %1422 = vmatpush1.msra.mxu0 0.0
      %1423 = vmatprep.subr.mxu0 0.0
      %1424 = vmatpush1.msra.mxu0 0.0
      %1425 = vmatprep.subr.mxu0 0.0
      %1426 = vmatpush1.msra.mxu0 0.0
      %1427 = vmatprep.subr.mxu0 0.0
      %1428 = vmatpush1.msra.mxu0 0.0
      %1429 = vmatprep.subr.mxu0 0.0
      %1430 = vmatpush1.msra.mxu0 0.0
      %1431 = vmatprep.subr.mxu0 0.0
      %1432 = vmatpush1.msra.mxu0 0.0
      %1433 = vmatprep.subr.mxu0 0.0
      %1434 = vmatpush1.msra.mxu0 0.0
      %1435 = vmatprep.subr.mxu0 0.0
      %1436 = vmatpush1.msra.mxu0 0.0
      %1437 = vmatprep.subr.mxu0 0.0
      %1438 = vmatpush1.msra.mxu0 0.0
      %1439 = vmatprep.subr.mxu0 0.0
      %1440 = vmatpush1.msra.mxu0 0.0
      %1441 = vmatprep.subr.mxu0 0.0
      %1442 = vmatpush1.msra.mxu0 0.0
      %1443 = vmatprep.subr.mxu0 0.0
      %1444 = vmatpush1.msra.mxu0 0.0
      %1445 = vmatprep.subr.mxu0 0.0
      %1446 = vmatpush1.msra.mxu0 0.0
      %1447 = vmatprep.subr.mxu0 0.0
      %1448 = vmatpush1.msra.mxu0 0.0
      %1449 = vmatprep.subr.mxu0 0.0
      %1450 = vmatpush1.msra.mxu0 0.0
      %1451 = vmatprep.subr.mxu0 0.0
      %1452 = vmatpush1.msra.mxu0 0.0
      %1453 = vmatprep.mubr.f32.mxu0 0.0
      %1454 = vmatmul.mubr.f32.gmra.mrb[0].mxu0 %v1156
      %v1455 = vpop.f32.mrb[0].mxu0
      %v1456 = vadd.f32 %v1351, %v1455
      %v1457 = vpop.f32.mrb[0].mxu0
      %1458 = vmatprep.mubr.f32.mxu0 0.0
      %1459 = vmatmul.mubr.f32.gmra.mrb[0].mxu0 %v1159
      %v1460 = vpop.f32.mrb[0].mxu0
      %v1461 = vadd.f32 %v1356, %v1460
      %v1462 = vpop.f32.mrb[0].mxu0
      %1463 = vmatprep.mubr.f32.mxu0 0.0
      %1464 = vmatmul.mubr.f32.gmra.mrb[0].mxu0 %v1162
      %v1465 = vpop.f32.mrb[0].mxu0
      %v1466 = vadd.f32 %v1361, %v1465
      %v1467 = vpop.f32.mrb[0].mxu0
      %1468 = vmatprep.mubr.f32.mxu0 0.0
      %1469 = vmatmul.mubr.f32.gmra.mrb[0].mxu0 %v1165
      %v1470 = vpop.f32.mrb[0].mxu0
      %v1471 = vadd.f32 %v1366, %v1470
      %v1472 = vpop.f32.mrb[0].mxu0
      %1473 = vmatprep.mubr.f32.mxu0 0.0
      %1474 = vmatmul.mubr.f32.gmra.mrb[0].mxu0 %v1168
      %v1475 = vpop.f32.mrb[0].mxu0
      %v1476 = vadd.f32 %v1371, %v1475
      %v1477 = vpop.f32.mrb[0].mxu0
      %1478 = vmatprep.mubr.f32.mxu0 0.0
      %1479 = vmatmul.mubr.f32.gmra.mrb[0].mxu0 %v1171
      %v1480 = vpop.f32.mrb[0].mxu0
      %v1481 = vadd.f32 %v1376, %v1480
      %v1482 = vpop.f32.mrb[0].mxu0
      %1483 = vmatprep.mubr.f32.mxu0 0.0
      %1484 = vmatmul.mubr.f32.gmra.mrb[0].mxu0 %v1174
      %v1485 = vpop.f32.mrb[0].mxu0
      %v1486 = vadd.f32 %v1381, %v1485
      %v1487 = vpop.f32.mrb[0].mxu0
      %1488 = vmatprep.mubr.f32.mxu0 0.0
      %1489 = vmatmul.mubr.f32.gmra.mrb[0].mxu0 %v1177
      %v1490 = vpop.f32.mrb[0].mxu0
      %v1491 = vadd.f32 %v1386, %v1490
      %v1492 = vpop.f32.mrb[0].mxu0
      %1493 = vdwg.mxu0
      %v1494 = vmax.f32 %v1456, 0.0
      %v1495 = vmax.f32 %v1461, 0.0
      %v1496 = vmax.f32 %v1466, 0.0
      %v1497 = vmax.f32 %v1471, 0.0
      %v1498 = vmax.f32 %v1476, 0.0
      %v1499 = vmax.f32 %v1481, 0.0
      %v1500 = vmax.f32 %v1486, 0.0
      %v1501 = vmax.f32 %v1491, 0.0
      %1510 = vrot.lane.b32.xlu0 %v799, 64
      %v1511 = vpop.permute.xlu0 %1510
      %1512 = vrot.lane.b32.xlu0 %v800, 64
      %v1513 = vpop.permute.xlu0 %1512
      %1514 = vrot.lane.b32.xlu0 %v801, 64
      %v1515 = vpop.permute.xlu0 %1514
      %1516 = vrot.lane.b32.xlu0 %v802, 64
      %v1517 = vpop.permute.xlu0 %1516
      %1518 = vrot.lane.b32.xlu0 %v803, 64
      %v1519 = vpop.permute.xlu0 %1518
      %1520 = vrot.lane.b32.xlu0 %v804, 64
      %v1521 = vpop.permute.xlu0 %1520
      %1522 = vrot.lane.b32.xlu0 %v805, 64
      %v1523 = vpop.permute.xlu0 %1522
      %1524 = vrot.lane.b32.xlu0 %v806, 64
      %v1525 = vpop.permute.xlu0 %1524
      %v1534 = vadd.f32 %v1494, %v1511
      %v1535 = vadd.f32 %v1495, %v1513
      %v1536 = vadd.f32 %v1496, %v1515
      %v1537 = vadd.f32 %v1497, %v1517
      %v1538 = vadd.f32 %v1498, %v1519
      %v1539 = vadd.f32 %v1499, %v1521
      %v1540 = vadd.f32 %v1500, %v1523
      %v1541 = vadd.f32 %v1501, %v1525
      %1542 = vst.msk [vmem:[%s224] sm:$0xff] %vm488, %v1534
      %1543 = vst.msk [vmem:[%s224 + $0x8] sm:$0xff] %vm488, %v1535
      %1544 = vst.msk [vmem:[%s224 + $0x10] sm:$0xff] %vm488, %v1536
      %1545 = vst.msk [vmem:[%s224 + $0x18] sm:$0xff] %vm488, %v1537
      %1546 = vst.msk [vmem:[%s224 + $0x20] sm:$0xff] %vm488, %v1538
      %1547 = vst.msk [vmem:[%s224 + $0x28] sm:$0xff] %vm488, %v1539
      %1548 = vst.msk [vmem:[%s224 + $0x30] sm:$0xff] %vm488, %v1540
      %1549 = vst.msk [vmem:[%s224 + $0x38] sm:$0xff] %vm488, %v1541
      %p1550 = scmp.lt.s32.totalorder %s16, 1
      %s1551 = scalar_select %p1550, %s16, 1
      %s1552 = smul.addr %s1551, 8
      %s1553 = smul.addr %s1552, 8
      %s1554 = scalar_lea.vmem %s5, %s1553
      // Predicated region
      $region41: #{block_b_forward.1} parent=39 // pred_check
        %p1555 = pneg %p144
      $region42: #{block_b_forward.1} parent=39 // pred_check_branch
        %1557 = sbr.rel (%p1555) target = $region44
      $region43: #{block_b_forward.1} parent=39 // pred_region
        _
      $region44: #{block_b_forward.1} parent=39 // pred_fallthru
        _
    $region40: #{block_b_forward.1} parent=5 // pred_fallthru
      _
    %p1558 = scmp.le.s32.totalorder 2, %s11
    // Predicated region
    $region45: #{block_b_forward.1} parent=5 // pred_check
      %p1559 = pneg %p1558
    $region46: #{block_b_forward.1} parent=5 // pred_check_branch
      %1561 = sbr.rel (%p1559) target = $region48
    $region47: #{block_b_forward.1} parent=5 // pred_region
      %s1562 = ssub.s32 %s11, 2
      // Predicated region
      $region49: #{block_b_forward.1} parent=47 // pred_check
        %p1563 = pneg %p150
      $region50: #{block_b_forward.1} parent=47 // pred_check_branch
        %1565 = sbr.rel (%p1563) target = $region52
      $region51: #{block_b_forward.1} parent=47 // pred_region
        %p1566 = scmp.lt.s32.totalorder %s17, 1
        %s1567 = scalar_select %p1566, %s17, 1
        %s1568 = smul.addr %s1567, 8
        %s1569 = smul.addr %s1568, 8
        %s1570 = scalar_lea.vmem %s5, %s1569
      $region52: #{block_b_forward.1} parent=47 // pred_fallthru
        _
    $region48: #{block_b_forward.1} parent=5 // pred_fallthru
      _
  $region6: #{block_b_forward.1} parent=0 // loop_footer
    %s15 = sadd.s32 1, %s11
  $region7: #{block_b_forward.1} parent=0 // loop_footer_branch
    %10 = sbr.rel target = $region3
  $region8: #{block_b_forward.1} parent=0 // loop_exit
    _

</llo_original>
